<compile_context>
chip_gen: v6e
topology: v6e:2x2x1
jax: 0.10.0
libtpu: 0.0.40
codegen_flags: <defaults>
</compile_context>

<pallas_src>
import jax
import jax.numpy as jnp
from jax.experimental import pallas as pl
from jax.experimental.pallas import tpu as pltpu  # noqa: F401 (kept for TPU-specific tuning hooks)

N_BATCH = 2
H_IN = W_IN = 28          # implied by 16*12*12 after conv5 + pool2
C_OUT = 16
K = 5
H_CONV = W_CONV = H_IN - K + 1      # 24
H_POOL = W_POOL = H_CONV // 2       # 12
FLAT = C_OUT * H_POOL * W_POOL      # 2304
FC1 = 120
FC2 = 10


# ---------------------------------------------------------------------------
# Kernel B: fc1 + ReLU + fc2 (two chained MXU matmuls)
# ---------------------------------------------------------------------------
def _fc_kernel(x_ref, w1_ref, b1_ref, w2_ref, b2_ref, o_ref):
    h = jnp.dot(x_ref[...], w1_ref[...], preferred_element_type=jnp.float32)
    h = jnp.maximum(h + b1_ref[...], 0.0)
    o_ref[...] = jnp.dot(h, w2_ref[...],
                         preferred_element_type=jnp.float32) + b2_ref[...]


# ---------------------------------------------------------------------------
# Trace-time glue: im2col patches for the fused conv+pool kernel
# ---------------------------------------------------------------------------
def _build_patches(x):
    """x: (N, 1, 28, 28) -> (4*N*144, 25).

    Rows are q-major (q = 2x2 pool offset), then (n, h, w); columns are the
    5x5 patch taps in (di, dj) order. Slab q=(a,b), row (n,h,w) holds the
    patch feeding conv position (2h+a, 2w+b). XLA fuses these slices.
    """
    n = x.shape[0]
    x2 = x[:, 0]  # (N, 28, 28)
    slabs = []
    for a in range(2):
        for b in range(2):
            cols = []
            for di in range(K):
                for dj in range(K):
                    sl = x2[:, a + di: a + di + 2 * H_POOL: 2,
                               b + dj: b + dj + 2 * W_POOL: 2]   # (N,12,12)
                    cols.append(sl)
            slabs.append(jnp.stack(cols, axis=-1)
                            .reshape(n * H_POOL * W_POOL, K * K))
    return jnp.concatenate(slabs, axis=0)   # (4*N*144, 25)


def lenet_forward(x, Wc, bc, W1, b1, W2, b2):
    n = x.shape[0]
    m = n * H_POOL * W_POOL          # pooled rows (n, h, w)
    m4 = 4 * m                       # with the 4 pool offsets, q-major

    patches = _build_patches(x)                       # (4m, 25)
    wc_mat = Wc.reshape(C_OUT, K * K).T               # (25, 16)
    bc_mat = bc.reshape(1, C_OUT)                     # (1, 16)

    # Kernel A: single im2col matmul -> max over the 4 offset slabs ->
    # bias + ReLU once.
    def convpool_kernel(p_ref, w_ref, b_ref, o_ref):
        y = jnp.dot(p_ref[...], w_ref[...],
                    preferred_element_type=jnp.float32)          # (4m, 16)
        acc = y[0:m]                                             # slab q=0
        for q in range(1, 4):                                    # static unroll
            acc = jnp.maximum(acc, y[q * m:(q + 1) * m])
        o_ref[...] = jnp.maximum(acc + b_ref[...], 0.0)

    pooled = pl.pallas_call(
        convpool_kernel,
        out_shape=jax.ShapeDtypeStruct((m, C_OUT), jnp.float32),
        grid=(1,),
        in_specs=[
            pl.BlockSpec((m4, K * K), lambda i: (0, 0)),
            pl.BlockSpec((K * K, C_OUT), lambda i: (0, 0)),
            pl.BlockSpec((1, C_OUT), lambda i: (0, 0)),
        ],
        out_specs=pl.BlockSpec((m, C_OUT), lambda i: (0, 0)),
    )(patches, wc_mat, bc_mat)                                   # (m, 16)

    # (N*144, 16) -> (N, 2304): same row-major element order => XLA bitcast,
    # no transpose and no data movement.
    flat = pooled.reshape(n, FLAT)

    # Permute fc1's input dimension from PyTorch's (c, h, w) flatten order to
    # the kernel's natural (h, w, c) order. Weight-side permutation is free
    # relative to the old per-call activation transpose.
    w1p = (W1.reshape(FC1, C_OUT, H_POOL, W_POOL)
             .transpose(2, 3, 1, 0)
             .reshape(FLAT, FC1))                                # (2304, 120)

    out = pl.pallas_call(
        _fc_kernel,
        out_shape=jax.ShapeDtypeStruct((n, FC2), jnp.float32),
        grid=(1,),
        in_specs=[
            pl.BlockSpec((n, FLAT), lambda i: (0, 0)),
            pl.BlockSpec((FLAT, FC1), lambda i: (0, 0)),
            pl.BlockSpec((1, FC1), lambda i: (0, 0)),
            pl.BlockSpec((FC1, FC2), lambda i: (0, 0)),
            pl.BlockSpec((1, FC2), lambda i: (0, 0)),
        ],
        out_specs=pl.BlockSpec((n, FC2), lambda i: (0, 0)),
    )(flat, w1p, b1.reshape(1, FC1), W2.T, b2.reshape(1, FC2))
    return out


# ---------------------------------------------------------------------------
# Pure-JAX reference (mirrors the PyTorch forward exactly)
# ---------------------------------------------------------------------------
def lenet_reference(x, Wc, bc, W1, b1, W2, b2):
    y = jax.lax.conv_general_dilated(
        x, Wc, window_strides=(1, 1), padding="VALID",
        dimension_numbers=("NCHW", "OIHW", "NCHW"))
    y = jnp.maximum(y + bc.reshape(1, C_OUT, 1, 1), 0.0)
    y = y.reshape(x.shape[0], C_OUT, H_POOL, 2, W_POOL, 2).max(axis=(3, 5))
    flat = y.reshape(x.shape[0], FLAT)
    h = jnp.maximum(flat @ W1.T + b1, 0.0)
    return h @ W2.T + b2


if __name__ == "__main__":
    key = jax.random.PRNGKey(0)
    kx, kwc, kbc, kw1, kb1, kw2, kb2 = jax.random.split(key, 7)

    x = jax.random.normal(kx, (N_BATCH, 1, H_IN, W_IN), dtype=jnp.float32)

    # Deterministic synthetic parameters (shapes match nn.Module __init__).
    Wc = 0.1 * jax.random.normal(kwc, (C_OUT, 1, K, K), dtype=jnp.float32)
    bc = 0.1 * jax.random.normal(kbc, (C_OUT,), dtype=jnp.float32)
    W1 = 0.05 * jax.random.normal(kw1, (FC1, FLAT), dtype=jnp.float32)
    b1 = 0.05 * jax.random.normal(kb1, (FC1,), dtype=jnp.float32)
    W2 = 0.05 * jax.random.normal(kw2, (FC2, FC1), dtype=jnp.float32)
    b2 = 0.05 * jax.random.normal(kb2, (FC2,), dtype=jnp.float32)

    out = jax.jit(lenet_forward)(x, Wc, bc, W1, b1, W2, b2)
    out = jax.block_until_ready(out)

    ref = lenet_reference(x, Wc, bc, W1, b1, W2, b2)
    assert out.shape == (N_BATCH, FC2)
    assert jnp.allclose(out, ref, atol=1e-3, rtol=1e-3), (out, ref)

    print("KERNEL_OK")
</pallas_src>

<mosaic_0001>
module attributes {stable_mosaic.version = 11 : i64} {
  func.func @convpool_kernel(%arg0: i32, %arg1: memref<1152x25xf32, #tpu.memory_space<vmem>>, %arg2: memref<25x16xf32, #tpu.memory_space<vmem>>, %arg3: memref<1x16xf32, #tpu.memory_space<vmem>>, %arg4: memref<288x16xf32, #tpu.memory_space<vmem>>) attributes {dimension_semantics = [#tpu.dimension_semantics<arbitrary>], iteration_bounds = array<i64: 1>, scalar_prefetch = 0 : i64, scratch_operands = 0 : i64, tpu.core_type = #tpu.core_type<tc>, window_params = [{pipeline_mode = #tpu.pipeline_mode<synchronous>, transform_indices = @transform_0, window_bounds = array<i64: 1152, 25>}, {pipeline_mode = #tpu.pipeline_mode<synchronous>, transform_indices = @transform_1, window_bounds = array<i64: 25, 16>}, {pipeline_mode = #tpu.pipeline_mode<synchronous>, transform_indices = @transform_2, window_bounds = array<i64: 1, 16>}, {pipeline_mode = #tpu.pipeline_mode<synchronous>, transform_indices = @transform_3, window_bounds = array<i64: 288, 16>}]} {
    %c0 = arith.constant 0 : index
    %c0_0 = arith.constant 0 : index
    %0 = vector.load %arg1[%c0, %c0_0] : memref<1152x25xf32, #tpu.memory_space<vmem>>, vector<1152x25xf32>
    %c0_1 = arith.constant 0 : index
    %c0_2 = arith.constant 0 : index
    %1 = vector.load %arg2[%c0_1, %c0_2] : memref<25x16xf32, #tpu.memory_space<vmem>>, vector<25x16xf32>
    %cst = arith.constant dense<0.000000e+00> : vector<1152x16xf32>
    %2 = tpu.matmul %0, %1, %cst {dimension_numbers = #tpu.dot_dimension_numbers<[1], [0], [0], [1], [0, 0, 1, 1], [], []>} : vector<1152x25xf32>, vector<25x16xf32>, vector<1152x16xf32> -> vector<1152x16xf32>
    %3 = vector.extract_strided_slice %2 {offsets = [0, 0], sizes = [288, 16], strides = [1, 1]} : vector<1152x16xf32> to vector<288x16xf32>
    %4 = vector.extract_strided_slice %2 {offsets = [288, 0], sizes = [288, 16], strides = [1, 1]} : vector<1152x16xf32> to vector<288x16xf32>
    %5 = arith.maximumf %3, %4 : vector<288x16xf32>
    %6 = vector.extract_strided_slice %2 {offsets = [576, 0], sizes = [288, 16], strides = [1, 1]} : vector<1152x16xf32> to vector<288x16xf32>
    %7 = arith.maximumf %5, %6 : vector<288x16xf32>
    %8 = vector.extract_strided_slice %2 {offsets = [864, 0], sizes = [288, 16], strides = [1, 1]} : vector<1152x16xf32> to vector<288x16xf32>
    %9 = arith.maximumf %7, %8 : vector<288x16xf32>
    %c0_3 = arith.constant 0 : index
    %c0_4 = arith.constant 0 : index
    %10 = vector.load %arg3[%c0_3, %c0_4] : memref<1x16xf32, #tpu.memory_space<vmem>>, vector<1x16xf32>
    %11 = vector.broadcast %10 : vector<1x16xf32> to vector<288x16xf32>
    %12 = arith.addf %9, %11 : vector<288x16xf32>
    %cst_5 = arith.constant 0.000000e+00 : f32
    %13 = vector.broadcast %cst_5 : f32 to vector<288x16xf32>
    %14 = arith.maximumf %12, %13 : vector<288x16xf32>
    %c0_6 = arith.constant 0 : index
    %c0_7 = arith.constant 0 : index
    %15 = vector.load %arg4[%c0_6, %c0_7] : memref<288x16xf32, #tpu.memory_space<vmem>>, vector<288x16xf32>
    tpu.vector_store %arg4[%c0_6, %c0_7], %14 {strides = array<i32>} : memref<288x16xf32, #tpu.memory_space<vmem>>, vector<288x16xf32>,
    return
  }
  func.func @transform_0(%arg0: i32) -> (i32, i32) {
    %c0_i32 = arith.constant 0 : i32
    %c0_i32_0 = arith.constant 0 : i32
    %c0_i32_1 = arith.constant 0 : i32
    return %c0_i32, %c0_i32_0 : i32, i32
  }
  func.func @transform_1(%arg0: i32) -> (i32, i32) {
    %c0_i32 = arith.constant 0 : i32
    %c0_i32_0 = arith.constant 0 : i32
    %c0_i32_1 = arith.constant 0 : i32
    return %c0_i32, %c0_i32_0 : i32, i32
  }
  func.func @transform_2(%arg0: i32) -> (i32, i32) {
    %c0_i32 = arith.constant 0 : i32
    %c0_i32_0 = arith.constant 0 : i32
    %c0_i32_1 = arith.constant 0 : i32
    return %c0_i32, %c0_i32_0 : i32, i32
  }
  func.func @transform_3(%arg0: i32) -> (i32, i32) {
    %c0_i32 = arith.constant 0 : i32
    %c0_i32_0 = arith.constant 0 : i32
    %c0_i32_1 = arith.constant 0 : i32
    return %c0_i32, %c0_i32_0 : i32, i32
  }
}

module attributes {stable_mosaic.version = 11 : i64} {
  func.func @_fc_kernel(%arg0: i32, %arg1: memref<2x2304xf32, #tpu.memory_space<vmem>>, %arg2: memref<2304x120xf32, #tpu.memory_space<vmem>>, %arg3: memref<1x120xf32, #tpu.memory_space<vmem>>, %arg4: memref<120x10xf32, #tpu.memory_space<vmem>>, %arg5: memref<1x10xf32, #tpu.memory_space<vmem>>, %arg6: memref<2x10xf32, #tpu.memory_space<vmem>>) attributes {dimension_semantics = [#tpu.dimension_semantics<arbitrary>], iteration_bounds = array<i64: 1>, scalar_prefetch = 0 : i64, scratch_operands = 0 : i64, tpu.core_type = #tpu.core_type<tc>, window_params = [{pipeline_mode = #tpu.pipeline_mode<synchronous>, transform_indices = @transform_0, window_bounds = array<i64: 2, 2304>}, {pipeline_mode = #tpu.pipeline_mode<synchronous>, transform_indices = @transform_1, window_bounds = array<i64: 2304, 120>}, {pipeline_mode = #tpu.pipeline_mode<synchronous>, transform_indices = @transform_2, window_bounds = array<i64: 1, 120>}, {pipeline_mode = #tpu.pipeline_mode<synchronous>, transform_indices = @transform_3, window_bounds = array<i64: 120, 10>}, {pipeline_mode = #tpu.pipeline_mode<synchronous>, transform_indices = @transform_4, window_bounds = array<i64: 1, 10>}, {pipeline_mode = #tpu.pipeline_mode<synchronous>, transform_indices = @transform_5, window_bounds = array<i64: 2, 10>}]} {
    %c0 = arith.constant 0 : index
    %c0_0 = arith.constant 0 : index
    %0 = vector.load %arg1[%c0, %c0_0] : memref<2x2304xf32, #tpu.memory_space<vmem>>, vector<2x2304xf32>
    %c0_1 = arith.constant 0 : index
    %c0_2 = arith.constant 0 : index
    %1 = vector.load %arg2[%c0_1, %c0_2] : memref<2304x120xf32, #tpu.memory_space<vmem>>, vector<2304x120xf32>
    %cst = arith.constant dense<0.000000e+00> : vector<2x120xf32>
    %2 = tpu.matmul %0, %1, %cst {dimension_numbers = #tpu.dot_dimension_numbers<[1], [0], [0], [1], [0, 0, 1, 1], [], []>} : vector<2x2304xf32>, vector<2304x120xf32>, vector<2x120xf32> -> vector<2x120xf32>
    %c0_3 = arith.constant 0 : index
    %c0_4 = arith.constant 0 : index
    %3 = vector.load %arg3[%c0_3, %c0_4] : memref<1x120xf32, #tpu.memory_space<vmem>>, vector<1x120xf32>
    %4 = vector.broadcast %3 : vector<1x120xf32> to vector<2x120xf32>
    %5 = arith.addf %2, %4 : vector<2x120xf32>
    %cst_5 = arith.constant 0.000000e+00 : f32
    %6 = vector.broadcast %cst_5 : f32 to vector<2x120xf32>
    %7 = arith.maximumf %5, %6 : vector<2x120xf32>
    %c0_6 = arith.constant 0 : index
    %c0_7 = arith.constant 0 : index
    %8 = vector.load %arg4[%c0_6, %c0_7] : memref<120x10xf32, #tpu.memory_space<vmem>>, vector<120x10xf32>
    %cst_8 = arith.constant dense<0.000000e+00> : vector<2x10xf32>
    %9 = tpu.matmul %7, %8, %cst_8 {dimension_numbers = #tpu.dot_dimension_numbers<[1], [0], [0], [1], [0, 0, 1, 1], [], []>} : vector<2x120xf32>, vector<120x10xf32>, vector<2x10xf32> -> vector<2x10xf32>
    %c0_9 = arith.constant 0 : index
    %c0_10 = arith.constant 0 : index
    %10 = vector.load %arg5[%c0_9, %c0_10] : memref<1x10xf32, #tpu.memory_space<vmem>>, vector<1x10xf32>
    %11 = vector.broadcast %10 : vector<1x10xf32> to vector<2x10xf32>
    %12 = arith.addf %9, %11 : vector<2x10xf32>
    %c0_11 = arith.constant 0 : index
    %c0_12 = arith.constant 0 : index
    %13 = vector.load %arg6[%c0_11, %c0_12] : memref<2x10xf32, #tpu.memory_space<vmem>>, vector<2x10xf32>
    tpu.vector_store %arg6[%c0_11, %c0_12], %12 {strides = array<i32>} : memref<2x10xf32, #tpu.memory_space<vmem>>, vector<2x10xf32>,
    return
  }
  func.func @transform_0(%arg0: i32) -> (i32, i32) {
    %c0_i32 = arith.constant 0 : i32
    %c0_i32_0 = arith.constant 0 : i32
    %c0_i32_1 = arith.constant 0 : i32
    return %c0_i32, %c0_i32_0 : i32, i32
  }
  func.func @transform_1(%arg0: i32) -> (i32, i32) {
    %c0_i32 = arith.constant 0 : i32
    %c0_i32_0 = arith.constant 0 : i32
    %c0_i32_1 = arith.constant 0 : i32
    return %c0_i32, %c0_i32_0 : i32, i32
  }
  func.func @transform_2(%arg0: i32) -> (i32, i32) {
    %c0_i32 = arith.constant 0 : i32
    %c0_i32_0 = arith.constant 0 : i32
    %c0_i32_1 = arith.constant 0 : i32
    return %c0_i32, %c0_i32_0 : i32, i32
  }
  func.func @transform_3(%arg0: i32) -> (i32, i32) {
    %c0_i32 = arith.constant 0 : i32
    %c0_i32_0 = arith.constant 0 : i32
    %c0_i32_1 = arith.constant 0 : i32
    return %c0_i32, %c0_i32_0 : i32, i32
  }
  func.func @transform_4(%arg0: i32) -> (i32, i32) {
    %c0_i32 = arith.constant 0 : i32
    %c0_i32_0 = arith.constant 0 : i32
    %c0_i32_1 = arith.constant 0 : i32
    return %c0_i32, %c0_i32_0 : i32, i32
  }
  func.func @transform_5(%arg0: i32) -> (i32, i32) {
    %c0_i32 = arith.constant 0 : i32
    %c0_i32_0 = arith.constant 0 : i32
    %c0_i32_1 = arith.constant 0 : i32
    return %c0_i32, %c0_i32_0 : i32, i32
  }
}

</mosaic_0001>

<llo_original>
// kernel: lenet_forward.2
$region0: #{lenet_forward.2}
  #allocation0 [shape = 'u32[]', space=smem, size = 0x4, offset = 0x4, fixed_abs, tag = 'smem constant byte address 0x4 - core index']
  #allocation1 [shape = 'u32[144,128]{1,0:T(1,128)}', space=vmem, size = 0x12000, scoped, tag = 'internal scratch']
  %s0 = inlined_call_operand.vmem [shape: f32[1152,25], index: 0, kind: input, shape index: {}]
  %s1 = inlined_call_operand.vmem [shape: f32[25,16], index: 1, kind: input, shape index: {}]
  %s2 = inlined_call_operand.vmem [shape: f32[1,16], index: 2, kind: input, shape index: {}]
  %s3 = inlined_call_operand.vmem [shape: f32[288,16], index: 3, kind: output, shape index: {}]
  %s4 = sld [smem:[#allocation0]]
  $region22: #{lenet_forward.2} parent=0
    _
  %s6 = ssub.s32 1, %s4
  %s7 = scalar_select 0, %s6, %s4
  // Predicated region
  $region2: #{lenet_forward.2} parent=0 // pred_check
    _
  $region3: #{lenet_forward.2} parent=0 // pred_check_branch
    %9 = sbr.rel (0) target = $region5
  $region4: #{lenet_forward.2} parent=0 // pred_region
    _
  $region5: #{lenet_forward.2} parent=0 // pred_fallthru
    _
  // Predicated region
  $region6: #{lenet_forward.2} parent=0 // pred_check
    _
  $region7: #{lenet_forward.2} parent=0 // pred_check_branch
    %11 = sbr.rel (0) target = $region9
  $region8: #{lenet_forward.2} parent=0 // pred_region
    _
  $region9: #{lenet_forward.2} parent=0 // pred_fallthru
    _
  // Predicated region
  $region10: #{lenet_forward.2} parent=0 // pred_check
    _
  $region11: #{lenet_forward.2} parent=0 // pred_check_branch
    %13 = sbr.rel (0) target = $region13
  $region12: #{lenet_forward.2} parent=0 // pred_region
    _
  $region13: #{lenet_forward.2} parent=0 // pred_fallthru
    _
  %v14 = vld [vmem:[%s0] sm:$0xff]
  %v15 = vld [vmem:[%s0 + $0x8] sm:$0xff]
  %v16 = vld [vmem:[%s0 + $0x10] sm:$0xff]
  %v17 = vld [vmem:[%s0 + $0x18] sm:$0xff]
  %v18 = vld [vmem:[%s0 + $0x20] sm:$0xff]
  %v19 = vld [vmem:[%s0 + $0x28] sm:$0xff]
  %v20 = vld [vmem:[%s0 + $0x30] sm:$0xff]
  %v21 = vld [vmem:[%s0 + $0x38] sm:$0xff]
  %v22 = vld [vmem:[%s0 + $0x40] sm:$0xff]
  %v23 = vld [vmem:[%s0 + $0x48] sm:$0xff]
  %v24 = vld [vmem:[%s0 + $0x50] sm:$0xff]
  %v25 = vld [vmem:[%s0 + $0x58] sm:$0xff]
  %v26 = vld [vmem:[%s0 + $0x60] sm:$0xff]
  %v27 = vld [vmem:[%s0 + $0x68] sm:$0xff]
  %v28 = vld [vmem:[%s0 + $0x70] sm:$0xff]
  %v29 = vld [vmem:[%s0 + $0x78] sm:$0xff]
  %v30 = vld [vmem:[%s0 + $0x80] sm:$0xff]
  %v31 = vld [vmem:[%s0 + $0x88] sm:$0xff]
  %v32 = vld [vmem:[%s0 + $0x90] sm:$0xff]
  %v33 = vld [vmem:[%s0 + $0x98] sm:$0xff]
  %v34 = vld [vmem:[%s0 + $0xa0] sm:$0xff]
  %v35 = vld [vmem:[%s0 + $0xa8] sm:$0xff]
  %v36 = vld [vmem:[%s0 + $0xb0] sm:$0xff]
  %v37 = vld [vmem:[%s0 + $0xb8] sm:$0xff]
  %v38 = vld [vmem:[%s0 + $0xc0] sm:$0xff]
  %v39 = vld [vmem:[%s0 + $0xc8] sm:$0xff]
  %v40 = vld [vmem:[%s0 + $0xd0] sm:$0xff]
  %v41 = vld [vmem:[%s0 + $0xd8] sm:$0xff]
  %v42 = vld [vmem:[%s0 + $0xe0] sm:$0xff]
  %v43 = vld [vmem:[%s0 + $0xe8] sm:$0xff]
  %v44 = vld [vmem:[%s0 + $0xf0] sm:$0xff]
  %v45 = vld [vmem:[%s0 + $0xf8] sm:$0xff]
  %v46 = vld [vmem:[%s0 + $0x100] sm:$0xff]
  %v47 = vld [vmem:[%s0 + $0x108] sm:$0xff]
  %v48 = vld [vmem:[%s0 + $0x110] sm:$0xff]
  %v49 = vld [vmem:[%s0 + $0x118] sm:$0xff]
  %v50 = vld [vmem:[%s0 + $0x120] sm:$0xff]
  %v51 = vld [vmem:[%s0 + $0x128] sm:$0xff]
  %v52 = vld [vmem:[%s0 + $0x130] sm:$0xff]
  %v53 = vld [vmem:[%s0 + $0x138] sm:$0xff]
  %v54 = vld [vmem:[%s0 + $0x140] sm:$0xff]
  %v55 = vld [vmem:[%s0 + $0x148] sm:$0xff]
  %v56 = vld [vmem:[%s0 + $0x150] sm:$0xff]
  %v57 = vld [vmem:[%s0 + $0x158] sm:$0xff]
  %v58 = vld [vmem:[%s0 + $0x160] sm:$0xff]
  %v59 = vld [vmem:[%s0 + $0x168] sm:$0xff]
  %v60 = vld [vmem:[%s0 + $0x170] sm:$0xff]
  %v61 = vld [vmem:[%s0 + $0x178] sm:$0xff]
  %v62 = vld [vmem:[%s0 + $0x180] sm:$0xff]
  %v63 = vld [vmem:[%s0 + $0x188] sm:$0xff]
  %v64 = vld [vmem:[%s0 + $0x190] sm:$0xff]
  %v65 = vld [vmem:[%s0 + $0x198] sm:$0xff]
  %v66 = vld [vmem:[%s0 + $0x1a0] sm:$0xff]
  %v67 = vld [vmem:[%s0 + $0x1a8] sm:$0xff]
  %v68 = vld [vmem:[%s0 + $0x1b0] sm:$0xff]
  %v69 = vld [vmem:[%s0 + $0x1b8] sm:$0xff]
  %v70 = vld [vmem:[%s0 + $0x1c0] sm:$0xff]
  %v71 = vld [vmem:[%s0 + $0x1c8] sm:$0xff]
  %v72 = vld [vmem:[%s0 + $0x1d0] sm:$0xff]
  %v73 = vld [vmem:[%s0 + $0x1d8] sm:$0xff]
  %v74 = vld [vmem:[%s0 + $0x1e0] sm:$0xff]
  %v75 = vld [vmem:[%s0 + $0x1e8] sm:$0xff]
  %v76 = vld [vmem:[%s0 + $0x1f0] sm:$0xff]
  %v77 = vld [vmem:[%s0 + $0x1f8] sm:$0xff]
  %v78 = vld [vmem:[%s0 + $0x200] sm:$0xff]
  %v79 = vld [vmem:[%s0 + $0x208] sm:$0xff]
  %v80 = vld [vmem:[%s0 + $0x210] sm:$0xff]
  %v81 = vld [vmem:[%s0 + $0x218] sm:$0xff]
  %v82 = vld [vmem:[%s0 + $0x220] sm:$0xff]
  %v83 = vld [vmem:[%s0 + $0x228] sm:$0xff]
  %v84 = vld [vmem:[%s0 + $0x230] sm:$0xff]
  %v85 = vld [vmem:[%s0 + $0x238] sm:$0xff]
  %v86 = vld [vmem:[%s0 + $0x240] sm:$0xff]
  %v87 = vld [vmem:[%s0 + $0x248] sm:$0xff]
  %v88 = vld [vmem:[%s0 + $0x250] sm:$0xff]
  %v89 = vld [vmem:[%s0 + $0x258] sm:$0xff]
  %v90 = vld [vmem:[%s0 + $0x260] sm:$0xff]
  %v91 = vld [vmem:[%s0 + $0x268] sm:$0xff]
  %v92 = vld [vmem:[%s0 + $0x270] sm:$0xff]
  %v93 = vld [vmem:[%s0 + $0x278] sm:$0xff]
  %v94 = vld [vmem:[%s0 + $0x280] sm:$0xff]
  %v95 = vld [vmem:[%s0 + $0x288] sm:$0xff]
  %v96 = vld [vmem:[%s0 + $0x290] sm:$0xff]
  %v97 = vld [vmem:[%s0 + $0x298] sm:$0xff]
  %v98 = vld [vmem:[%s0 + $0x2a0] sm:$0xff]
  %v99 = vld [vmem:[%s0 + $0x2a8] sm:$0xff]
  %v100 = vld [vmem:[%s0 + $0x2b0] sm:$0xff]
  %v101 = vld [vmem:[%s0 + $0x2b8] sm:$0xff]
  %v102 = vld [vmem:[%s0 + $0x2c0] sm:$0xff]
  %v103 = vld [vmem:[%s0 + $0x2c8] sm:$0xff]
  %v104 = vld [vmem:[%s0 + $0x2d0] sm:$0xff]
  %v105 = vld [vmem:[%s0 + $0x2d8] sm:$0xff]
  %v106 = vld [vmem:[%s0 + $0x2e0] sm:$0xff]
  %v107 = vld [vmem:[%s0 + $0x2e8] sm:$0xff]
  %v108 = vld [vmem:[%s0 + $0x2f0] sm:$0xff]
  %v109 = vld [vmem:[%s0 + $0x2f8] sm:$0xff]
  %v110 = vld [vmem:[%s0 + $0x300] sm:$0xff]
  %v111 = vld [vmem:[%s0 + $0x308] sm:$0xff]
  %v112 = vld [vmem:[%s0 + $0x310] sm:$0xff]
  %v113 = vld [vmem:[%s0 + $0x318] sm:$0xff]
  %v114 = vld [vmem:[%s0 + $0x320] sm:$0xff]
  %v115 = vld [vmem:[%s0 + $0x328] sm:$0xff]
  %v116 = vld [vmem:[%s0 + $0x330] sm:$0xff]
  %v117 = vld [vmem:[%s0 + $0x338] sm:$0xff]
  %v118 = vld [vmem:[%s0 + $0x340] sm:$0xff]
  %v119 = vld [vmem:[%s0 + $0x348] sm:$0xff]
  %v120 = vld [vmem:[%s0 + $0x350] sm:$0xff]
  %v121 = vld [vmem:[%s0 + $0x358] sm:$0xff]
  %v122 = vld [vmem:[%s0 + $0x360] sm:$0xff]
  %v123 = vld [vmem:[%s0 + $0x368] sm:$0xff]
  %v124 = vld [vmem:[%s0 + $0x370] sm:$0xff]
  %v125 = vld [vmem:[%s0 + $0x378] sm:$0xff]
  %v126 = vld [vmem:[%s0 + $0x380] sm:$0xff]
  %v127 = vld [vmem:[%s0 + $0x388] sm:$0xff]
  %v128 = vld [vmem:[%s0 + $0x390] sm:$0xff]
  %v129 = vld [vmem:[%s0 + $0x398] sm:$0xff]
  %v130 = vld [vmem:[%s0 + $0x3a0] sm:$0xff]
  %v131 = vld [vmem:[%s0 + $0x3a8] sm:$0xff]
  %v132 = vld [vmem:[%s0 + $0x3b0] sm:$0xff]
  %v133 = vld [vmem:[%s0 + $0x3b8] sm:$0xff]
  %v134 = vld [vmem:[%s0 + $0x3c0] sm:$0xff]
  %v135 = vld [vmem:[%s0 + $0x3c8] sm:$0xff]
  %v136 = vld [vmem:[%s0 + $0x3d0] sm:$0xff]
  %v137 = vld [vmem:[%s0 + $0x3d8] sm:$0xff]
  %v138 = vld [vmem:[%s0 + $0x3e0] sm:$0xff]
  %v139 = vld [vmem:[%s0 + $0x3e8] sm:$0xff]
  %v140 = vld [vmem:[%s0 + $0x3f0] sm:$0xff]
  %v141 = vld [vmem:[%s0 + $0x3f8] sm:$0xff]
  %v142 = vld [vmem:[%s0 + $0x400] sm:$0xff]
  %v143 = vld [vmem:[%s0 + $0x408] sm:$0xff]
  %v144 = vld [vmem:[%s0 + $0x410] sm:$0xff]
  %v145 = vld [vmem:[%s0 + $0x418] sm:$0xff]
  %v146 = vld [vmem:[%s0 + $0x420] sm:$0xff]
  %v147 = vld [vmem:[%s0 + $0x428] sm:$0xff]
  %v148 = vld [vmem:[%s0 + $0x430] sm:$0xff]
  %v149 = vld [vmem:[%s0 + $0x438] sm:$0xff]
  %v150 = vld [vmem:[%s0 + $0x440] sm:$0xff]
  %v151 = vld [vmem:[%s0 + $0x448] sm:$0xff]
  %v152 = vld [vmem:[%s0 + $0x450] sm:$0xff]
  %v153 = vld [vmem:[%s0 + $0x458] sm:$0xff]
  %v154 = vld [vmem:[%s0 + $0x460] sm:$0xff]
  %v155 = vld [vmem:[%s0 + $0x468] sm:$0xff]
  %v156 = vld [vmem:[%s0 + $0x470] sm:$0xff]
  %v157 = vld [vmem:[%s0 + $0x478] sm:$0xff]
  %v158 = vld [vmem:[%s1] sm:$0xff]
  %v159 = vld [vmem:[%s1 + $0x8] sm:$0xff]
  %v160 = vld [vmem:[%s1 + $0x10] sm:$0xff]
  %v161 = vld [vmem:[%s1 + $0x18] sm:$0x1]
  %vm162 = vcmask 203776
  %v164 = vsel %vm162, %v14, 0
  %v167 = vsel %vm162, %v15, 0
  %v170 = vsel %vm162, %v16, 0
  %v173 = vsel %vm162, %v17, 0
  %v176 = vsel %vm162, %v18, 0
  %v179 = vsel %vm162, %v19, 0
  %v182 = vsel %vm162, %v20, 0
  %v185 = vsel %vm162, %v21, 0
  %v188 = vsel %vm162, %v22, 0
  %v191 = vsel %vm162, %v23, 0
  %v194 = vsel %vm162, %v24, 0
  %v197 = vsel %vm162, %v25, 0
  %v200 = vsel %vm162, %v26, 0
  %v203 = vsel %vm162, %v27, 0
  %v206 = vsel %vm162, %v28, 0
  %v209 = vsel %vm162, %v29, 0
  %v212 = vsel %vm162, %v30, 0
  %v215 = vsel %vm162, %v31, 0
  %v218 = vsel %vm162, %v32, 0
  %v221 = vsel %vm162, %v33, 0
  %v224 = vsel %vm162, %v34, 0
  %v227 = vsel %vm162, %v35, 0
  %v230 = vsel %vm162, %v36, 0
  %v233 = vsel %vm162, %v37, 0
  %v236 = vsel %vm162, %v38, 0
  %v239 = vsel %vm162, %v39, 0
  %v242 = vsel %vm162, %v40, 0
  %v245 = vsel %vm162, %v41, 0
  %v248 = vsel %vm162, %v42, 0
  %v251 = vsel %vm162, %v43, 0
  %v254 = vsel %vm162, %v44, 0
  %v257 = vsel %vm162, %v45, 0
  %v260 = vsel %vm162, %v46, 0
  %v263 = vsel %vm162, %v47, 0
  %v266 = vsel %vm162, %v48, 0
  %v269 = vsel %vm162, %v49, 0
  %v272 = vsel %vm162, %v50, 0
  %v275 = vsel %vm162, %v51, 0
  %v278 = vsel %vm162, %v52, 0
  %v281 = vsel %vm162, %v53, 0
  %v284 = vsel %vm162, %v54, 0
  %v287 = vsel %vm162, %v55, 0
  %v290 = vsel %vm162, %v56, 0
  %v293 = vsel %vm162, %v57, 0
  %v296 = vsel %vm162, %v58, 0
  %v299 = vsel %vm162, %v59, 0
  %v302 = vsel %vm162, %v60, 0
  %v305 = vsel %vm162, %v61, 0
  %v308 = vsel %vm162, %v62, 0
  %v311 = vsel %vm162, %v63, 0
  %v314 = vsel %vm162, %v64, 0
  %v317 = vsel %vm162, %v65, 0
  %v320 = vsel %vm162, %v66, 0
  %v323 = vsel %vm162, %v67, 0
  %v326 = vsel %vm162, %v68, 0
  %v329 = vsel %vm162, %v69, 0
  %v332 = vsel %vm162, %v70, 0
  %v335 = vsel %vm162, %v71, 0
  %v338 = vsel %vm162, %v72, 0
  %v341 = vsel %vm162, %v73, 0
  %v344 = vsel %vm162, %v74, 0
  %v347 = vsel %vm162, %v75, 0
  %v350 = vsel %vm162, %v76, 0
  %v353 = vsel %vm162, %v77, 0
  %v356 = vsel %vm162, %v78, 0
  %v359 = vsel %vm162, %v79, 0
  %v362 = vsel %vm162, %v80, 0
  %v365 = vsel %vm162, %v81, 0
  %v368 = vsel %vm162, %v82, 0
  %v371 = vsel %vm162, %v83, 0
  %v374 = vsel %vm162, %v84, 0
  %v377 = vsel %vm162, %v85, 0
  %v380 = vsel %vm162, %v86, 0
  %v383 = vsel %vm162, %v87, 0
  %v386 = vsel %vm162, %v88, 0
  %v389 = vsel %vm162, %v89, 0
  %v392 = vsel %vm162, %v90, 0
  %v395 = vsel %vm162, %v91, 0
  %v398 = vsel %vm162, %v92, 0
  %v401 = vsel %vm162, %v93, 0
  %v404 = vsel %vm162, %v94, 0
  %v407 = vsel %vm162, %v95, 0
  %v410 = vsel %vm162, %v96, 0
  %v413 = vsel %vm162, %v97, 0
  %v416 = vsel %vm162, %v98, 0
  %v419 = vsel %vm162, %v99, 0
  %v422 = vsel %vm162, %v100, 0
  %v425 = vsel %vm162, %v101, 0
  %v428 = vsel %vm162, %v102, 0
  %v431 = vsel %vm162, %v103, 0
  %v434 = vsel %vm162, %v104, 0
  %v437 = vsel %vm162, %v105, 0
  %v440 = vsel %vm162, %v106, 0
  %v443 = vsel %vm162, %v107, 0
  %v446 = vsel %vm162, %v108, 0
  %v449 = vsel %vm162, %v109, 0
  %v452 = vsel %vm162, %v110, 0
  %v455 = vsel %vm162, %v111, 0
  %v458 = vsel %vm162, %v112, 0
  %v461 = vsel %vm162, %v113, 0
  %v464 = vsel %vm162, %v114, 0
  %v467 = vsel %vm162, %v115, 0
  %v470 = vsel %vm162, %v116, 0
  %v473 = vsel %vm162, %v117, 0
  %v476 = vsel %vm162, %v118, 0
  %v479 = vsel %vm162, %v119, 0
  %v482 = vsel %vm162, %v120, 0
  %v485 = vsel %vm162, %v121, 0
  %v488 = vsel %vm162, %v122, 0
  %v491 = vsel %vm162, %v123, 0
  %v494 = vsel %vm162, %v124, 0
  %v497 = vsel %vm162, %v125, 0
  %v500 = vsel %vm162, %v126, 0
  %v503 = vsel %vm162, %v127, 0
  %v506 = vsel %vm162, %v128, 0
  %v509 = vsel %vm162, %v129, 0
  %v512 = vsel %vm162, %v130, 0
  %v515 = vsel %vm162, %v131, 0
  %v518 = vsel %vm162, %v132, 0
  %v521 = vsel %vm162, %v133, 0
  %v524 = vsel %vm162, %v134, 0
  %v527 = vsel %vm162, %v135, 0
  %v530 = vsel %vm162, %v136, 0
  %v533 = vsel %vm162, %v137, 0
  %v536 = vsel %vm162, %v138, 0
  %v539 = vsel %vm162, %v139, 0
  %v542 = vsel %vm162, %v140, 0
  %v545 = vsel %vm162, %v141, 0
  %v548 = vsel %vm162, %v142, 0
  %v551 = vsel %vm162, %v143, 0
  %v554 = vsel %vm162, %v144, 0
  %v557 = vsel %vm162, %v145, 0
  %v560 = vsel %vm162, %v146, 0
  %v563 = vsel %vm162, %v147, 0
  %v566 = vsel %vm162, %v148, 0
  %v569 = vsel %vm162, %v149, 0
  %v572 = vsel %vm162, %v150, 0
  %v575 = vsel %vm162, %v151, 0
  %v578 = vsel %vm162, %v152, 0
  %v581 = vsel %vm162, %v153, 0
  %v584 = vsel %vm162, %v154, 0
  %v587 = vsel %vm162, %v155, 0
  %v590 = vsel %vm162, %v156, 0
  %v593 = vsel %vm162, %v157, 0
  %vm595 = vcmask 1040384
  %v597 = vsel %vm595, %v161, 0
  %599 = vmatprep.subr.mxu0 0.0
  %600 = vmatpush1.msra.mxu0 0.0
  %601 = vmatprep.subr.mxu0 0.0
  %602 = vmatpush1.msra.mxu0 0.0
  %603 = vmatprep.subr.mxu0 0.0
  %604 = vmatpush1.msra.mxu0 0.0
  %605 = vmatprep.subr.mxu0 0.0
  %606 = vmatpush1.msra.mxu0 0.0
  %607 = vmatprep.subr.mxu0 0.0
  %608 = vmatpush1.msra.mxu0 0.0
  %609 = vmatprep.subr.mxu0 0.0
  %610 = vmatpush1.msra.mxu0 0.0
  %611 = vmatprep.subr.mxu0 0.0
  %612 = vmatpush1.msra.mxu0 0.0
  %613 = vmatprep.subr.mxu0 0.0
  %614 = vmatpush1.msra.mxu0 0.0
  %615 = vmatprep.subr.mxu0 0.0
  %616 = vmatpush1.msra.mxu0 0.0
  %617 = vmatprep.subr.mxu0 0.0
  %618 = vmatpush1.msra.mxu0 0.0
  %619 = vmatprep.subr.mxu0 0.0
  %620 = vmatpush1.msra.mxu0 0.0
  %621 = vmatprep.subr.mxu0 0.0
  %622 = vmatpush1.msra.mxu0 0.0
  %623 = vmatprep.subr.mxu0 0.0
  %624 = vmatpush1.msra.mxu0 %v597
  %625 = vmatprep.subr.mxu0 0.0
  %626 = vmatpush1.msra.mxu0 %v160
  %627 = vmatprep.subr.mxu0 0.0
  %628 = vmatpush1.msra.mxu0 %v159
  %629 = vmatprep.subr.mxu0 0.0
  %630 = vmatpush1.msra.mxu0 %v158
  %631 = vmatprep.subr.mxu0 0.0
  %632 = vmatpush2.msra.mxu0 0.0
  %633 = vmatprep.subr.mxu0 0.0
  %634 = vmatpush2.msra.mxu0 0.0
  %635 = vmatprep.subr.mxu0 0.0
  %636 = vmatpush2.msra.mxu0 0.0
  %637 = vmatprep.subr.mxu0 0.0
  %638 = vmatpush2.msra.mxu0 0.0
  %639 = vmatprep.subr.mxu0 0.0
  %640 = vmatpush2.msra.mxu0 0.0
  %641 = vmatprep.subr.mxu0 0.0
  %642 = vmatpush2.msra.mxu0 0.0
  %643 = vmatprep.subr.mxu0 0.0
  %644 = vmatpush2.msra.mxu0 0.0
  %645 = vmatprep.subr.mxu0 0.0
  %646 = vmatpush2.msra.mxu0 0.0
  %647 = vmatprep.subr.mxu0 0.0
  %648 = vmatpush2.msra.mxu0 0.0
  %649 = vmatprep.subr.mxu0 0.0
  %650 = vmatpush2.msra.mxu0 0.0
  %651 = vmatprep.subr.mxu0 0.0
  %652 = vmatpush2.msra.mxu0 0.0
  %653 = vmatprep.subr.mxu0 0.0
  %654 = vmatpush2.msra.mxu0 0.0
  %655 = vmatprep.subr.mxu0 0.0
  %656 = vmatpush2.msra.mxu0 0.0
  %657 = vmatprep.subr.mxu0 0.0
  %658 = vmatpush2.msra.mxu0 0.0
  %659 = vmatprep.subr.mxu0 0.0
  %660 = vmatpush2.msra.mxu0 0.0
  %661 = vmatprep.subr.mxu0 0.0
  %662 = vmatpush2.msra.mxu0 0.0
  %663 = vmatprep.mubr.f32.mxu0 0.0
  %664 = vmatmul.mubr.f32.gmra.mxu0 %v164
  %v665 = vpop.f32.mrf.mxu0
  %v666 = vadd.f32 0.0, %v665
  %v667 = vpop.f32.mrf.mxu0
  %668 = vmatprep.mubr.f32.mxu0 0.0
  %669 = vmatmul.mubr.f32.gmra.mxu0 %v167
  %v670 = vpop.f32.mrf.mxu0
  %v671 = vadd.f32 0.0, %v670
  %v672 = vpop.f32.mrf.mxu0
  %673 = vmatprep.mubr.f32.mxu0 0.0
  %674 = vmatmul.mubr.f32.gmra.mxu0 %v170
  %v675 = vpop.f32.mrf.mxu0
  %v676 = vadd.f32 0.0, %v675
  %v677 = vpop.f32.mrf.mxu0
  %678 = vmatprep.mubr.f32.mxu0 0.0
  %679 = vmatmul.mubr.f32.gmra.mxu0 %v173
  %v680 = vpop.f32.mrf.mxu0
  %v681 = vadd.f32 0.0, %v680
  %v682 = vpop.f32.mrf.mxu0
  %683 = vmatprep.mubr.f32.mxu0 0.0
  %684 = vmatmul.mubr.f32.gmra.mxu0 %v176
  %v685 = vpop.f32.mrf.mxu0
  %v686 = vadd.f32 0.0, %v685
  %v687 = vpop.f32.mrf.mxu0
  %688 = vmatprep.mubr.f32.mxu0 0.0
  %689 = vmatmul.mubr.f32.gmra.mxu0 %v179
  %v690 = vpop.f32.mrf.mxu0
  %v691 = vadd.f32 0.0, %v690
  %v692 = vpop.f32.mrf.mxu0
  %693 = vmatprep.mubr.f32.mxu0 0.0
  %694 = vmatmul.mubr.f32.gmra.mxu0 %v182
  %v695 = vpop.f32.mrf.mxu0
  %v696 = vadd.f32 0.0, %v695
  %v697 = vpop.f32.mrf.mxu0
  %698 = vmatprep.mubr.f32.mxu0 0.0
  %699 = vmatmul.mubr.f32.gmra.mxu0 %v185
  %v700 = vpop.f32.mrf.mxu0
  %v701 = vadd.f32 0.0, %v700
  %v702 = vpop.f32.mrf.mxu0
  %703 = vmatprep.mubr.f32.mxu0 0.0
  %704 = vmatmul.mubr.f32.gmra.mxu0 %v188
  %v705 = vpop.f32.mrf.mxu0
  %v706 = vadd.f32 0.0, %v705
  %v707 = vpop.f32.mrf.mxu0
  %708 = vmatprep.mubr.f32.mxu0 0.0
  %709 = vmatmul.mubr.f32.gmra.mxu0 %v191
  %v710 = vpop.f32.mrf.mxu0
  %v711 = vadd.f32 0.0, %v710
  %v712 = vpop.f32.mrf.mxu0
  %713 = vmatprep.mubr.f32.mxu0 0.0
  %714 = vmatmul.mubr.f32.gmra.mxu0 %v194
  %v715 = vpop.f32.mrf.mxu0
  %v716 = vadd.f32 0.0, %v715
  %v717 = vpop.f32.mrf.mxu0
  %718 = vmatprep.mubr.f32.mxu0 0.0
  %719 = vmatmul.mubr.f32.gmra.mxu0 %v197
  %v720 = vpop.f32.mrf.mxu0
  %v721 = vadd.f32 0.0, %v720
  %v722 = vpop.f32.mrf.mxu0
  %723 = vmatprep.mubr.f32.mxu0 0.0
  %724 = vmatmul.mubr.f32.gmra.mxu0 %v200
  %v725 = vpop.f32.mrf.mxu0
  %v726 = vadd.f32 0.0, %v725
  %v727 = vpop.f32.mrf.mxu0
  %728 = vmatprep.mubr.f32.mxu0 0.0
  %729 = vmatmul.mubr.f32.gmra.mxu0 %v203
  %v730 = vpop.f32.mrf.mxu0
  %v731 = vadd.f32 0.0, %v730
  %v732 = vpop.f32.mrf.mxu0
  %733 = vmatprep.mubr.f32.mxu0 0.0
  %734 = vmatmul.mubr.f32.gmra.mxu0 %v206
  %v735 = vpop.f32.mrf.mxu0
  %v736 = vadd.f32 0.0, %v735
  %v737 = vpop.f32.mrf.mxu0
  %738 = vmatprep.mubr.f32.mxu0 0.0
  %739 = vmatmul.mubr.f32.gmra.mxu0 %v209
  %v740 = vpop.f32.mrf.mxu0
  %v741 = vadd.f32 0.0, %v740
  %v742 = vpop.f32.mrf.mxu0
  %743 = vmatprep.mubr.f32.mxu0 0.0
  %744 = vmatmul.mubr.f32.gmra.mxu0 %v212
  %v745 = vpop.f32.mrf.mxu0
  %v746 = vadd.f32 0.0, %v745
  %v747 = vpop.f32.mrf.mxu0
  %748 = vmatprep.mubr.f32.mxu0 0.0
  %749 = vmatmul.mubr.f32.gmra.mxu0 %v215
  %v750 = vpop.f32.mrf.mxu0
  %v751 = vadd.f32 0.0, %v750
  %v752 = vpop.f32.mrf.mxu0
  %753 = vmatprep.mubr.f32.mxu0 0.0
  %754 = vmatmul.mubr.f32.gmra.mxu0 %v218
  %v755 = vpop.f32.mrf.mxu0
  %v756 = vadd.f32 0.0, %v755
  %v757 = vpop.f32.mrf.mxu0
  %758 = vmatprep.mubr.f32.mxu0 0.0
  %759 = vmatmul.mubr.f32.gmra.mxu0 %v221
  %v760 = vpop.f32.mrf.mxu0
  %v761 = vadd.f32 0.0, %v760
  %v762 = vpop.f32.mrf.mxu0
  %763 = vmatprep.mubr.f32.mxu0 0.0
  %764 = vmatmul.mubr.f32.gmra.mxu0 %v224
  %v765 = vpop.f32.mrf.mxu0
  %v766 = vadd.f32 0.0, %v765
  %v767 = vpop.f32.mrf.mxu0
  %768 = vmatprep.mubr.f32.mxu0 0.0
  %769 = vmatmul.mubr.f32.gmra.mxu0 %v227
  %v770 = vpop.f32.mrf.mxu0
  %v771 = vadd.f32 0.0, %v770
  %v772 = vpop.f32.mrf.mxu0
  %773 = vmatprep.mubr.f32.mxu0 0.0
  %774 = vmatmul.mubr.f32.gmra.mxu0 %v230
  %v775 = vpop.f32.mrf.mxu0
  %v776 = vadd.f32 0.0, %v775
  %v777 = vpop.f32.mrf.mxu0
  %778 = vmatprep.mubr.f32.mxu0 0.0
  %779 = vmatmul.mubr.f32.gmra.mxu0 %v233
  %v780 = vpop.f32.mrf.mxu0
  %v781 = vadd.f32 0.0, %v780
  %v782 = vpop.f32.mrf.mxu0
  %783 = vmatprep.mubr.f32.mxu0 0.0
  %784 = vmatmul.mubr.f32.gmra.mxu0 %v236
  %v785 = vpop.f32.mrf.mxu0
  %v786 = vadd.f32 0.0, %v785
  %v787 = vpop.f32.mrf.mxu0
  %788 = vmatprep.mubr.f32.mxu0 0.0
  %789 = vmatmul.mubr.f32.gmra.mxu0 %v239
  %v790 = vpop.f32.mrf.mxu0
  %v791 = vadd.f32 0.0, %v790
  %v792 = vpop.f32.mrf.mxu0
  %793 = vmatprep.mubr.f32.mxu0 0.0
  %794 = vmatmul.mubr.f32.gmra.mxu0 %v242
  %v795 = vpop.f32.mrf.mxu0
  %v796 = vadd.f32 0.0, %v795
  %v797 = vpop.f32.mrf.mxu0
  %798 = vmatprep.mubr.f32.mxu0 0.0
  %799 = vmatmul.mubr.f32.gmra.mxu0 %v245
  %v800 = vpop.f32.mrf.mxu0
  %v801 = vadd.f32 0.0, %v800
  %v802 = vpop.f32.mrf.mxu0
  %803 = vmatprep.mubr.f32.mxu0 0.0
  %804 = vmatmul.mubr.f32.gmra.mxu0 %v248
  %v805 = vpop.f32.mrf.mxu0
  %v806 = vadd.f32 0.0, %v805
  %v807 = vpop.f32.mrf.mxu0
  %808 = vmatprep.mubr.f32.mxu0 0.0
  %809 = vmatmul.mubr.f32.gmra.mxu0 %v251
  %v810 = vpop.f32.mrf.mxu0
  %v811 = vadd.f32 0.0, %v810
  %v812 = vpop.f32.mrf.mxu0
  %813 = vmatprep.mubr.f32.mxu0 0.0
  %814 = vmatmul.mubr.f32.gmra.mxu0 %v254
  %v815 = vpop.f32.mrf.mxu0
  %v816 = vadd.f32 0.0, %v815
  %v817 = vpop.f32.mrf.mxu0
  %818 = vmatprep.mubr.f32.mxu0 0.0
  %819 = vmatmul.mubr.f32.gmra.mxu0 %v257
  %v820 = vpop.f32.mrf.mxu0
  %v821 = vadd.f32 0.0, %v820
  %v822 = vpop.f32.mrf.mxu0
  %823 = vmatprep.mubr.f32.mxu0 0.0
  %824 = vmatmul.mubr.f32.gmra.mxu0 %v260
  %v825 = vpop.f32.mrf.mxu0
  %v826 = vadd.f32 0.0, %v825
  %v827 = vpop.f32.mrf.mxu0
  %828 = vmatprep.mubr.f32.mxu0 0.0
  %829 = vmatmul.mubr.f32.gmra.mxu0 %v263
  %v830 = vpop.f32.mrf.mxu0
  %v831 = vadd.f32 0.0, %v830
  %v832 = vpop.f32.mrf.mxu0
  %833 = vmatprep.mubr.f32.mxu0 0.0
  %834 = vmatmul.mubr.f32.gmra.mxu0 %v266
  %v835 = vpop.f32.mrf.mxu0
  %v836 = vadd.f32 0.0, %v835
  %v837 = vpop.f32.mrf.mxu0
  %838 = vmatprep.mubr.f32.mxu0 0.0
  %839 = vmatmul.mubr.f32.gmra.mxu0 %v269
  %v840 = vpop.f32.mrf.mxu0
  %v841 = vadd.f32 0.0, %v840
  %v842 = vpop.f32.mrf.mxu0
  %843 = vmatprep.mubr.f32.mxu0 0.0
  %844 = vmatmul.mubr.f32.gmra.mxu0 %v272
  %v845 = vpop.f32.mrf.mxu0
  %v846 = vadd.f32 0.0, %v845
  %v847 = vpop.f32.mrf.mxu0
  %848 = vmatprep.mubr.f32.mxu0 0.0
  %849 = vmatmul.mubr.f32.gmra.mxu0 %v275
  %v850 = vpop.f32.mrf.mxu0
  %v851 = vadd.f32 0.0, %v850
  %v852 = vpop.f32.mrf.mxu0
  %853 = vmatprep.mubr.f32.mxu0 0.0
  %854 = vmatmul.mubr.f32.gmra.mxu0 %v278
  %v855 = vpop.f32.mrf.mxu0
  %v856 = vadd.f32 0.0, %v855
  %v857 = vpop.f32.mrf.mxu0
  %858 = vmatprep.mubr.f32.mxu0 0.0
  %859 = vmatmul.mubr.f32.gmra.mxu0 %v281
  %v860 = vpop.f32.mrf.mxu0
  %v861 = vadd.f32 0.0, %v860
  %v862 = vpop.f32.mrf.mxu0
  %863 = vmatprep.mubr.f32.mxu0 0.0
  %864 = vmatmul.mubr.f32.gmra.mxu0 %v284
  %v865 = vpop.f32.mrf.mxu0
  %v866 = vadd.f32 0.0, %v865
  %v867 = vpop.f32.mrf.mxu0
  %868 = vmatprep.mubr.f32.mxu0 0.0
  %869 = vmatmul.mubr.f32.gmra.mxu0 %v287
  %v870 = vpop.f32.mrf.mxu0
  %v871 = vadd.f32 0.0, %v870
  %v872 = vpop.f32.mrf.mxu0
  %873 = vmatprep.mubr.f32.mxu0 0.0
  %874 = vmatmul.mubr.f32.gmra.mxu0 %v290
  %v875 = vpop.f32.mrf.mxu0
  %v876 = vadd.f32 0.0, %v875
  %v877 = vpop.f32.mrf.mxu0
  %878 = vmatprep.mubr.f32.mxu0 0.0
  %879 = vmatmul.mubr.f32.gmra.mxu0 %v293
  %v880 = vpop.f32.mrf.mxu0
  %v881 = vadd.f32 0.0, %v880
  %v882 = vpop.f32.mrf.mxu0
  %883 = vmatprep.mubr.f32.mxu0 0.0
  %884 = vmatmul.mubr.f32.gmra.mxu0 %v296
  %v885 = vpop.f32.mrf.mxu0
  %v886 = vadd.f32 0.0, %v885
  %v887 = vpop.f32.mrf.mxu0
  %888 = vmatprep.mubr.f32.mxu0 0.0
  %889 = vmatmul.mubr.f32.gmra.mxu0 %v299
  %v890 = vpop.f32.mrf.mxu0
  %v891 = vadd.f32 0.0, %v890
  %v892 = vpop.f32.mrf.mxu0
  %893 = vmatprep.mubr.f32.mxu0 0.0
  %894 = vmatmul.mubr.f32.gmra.mxu0 %v302
  %v895 = vpop.f32.mrf.mxu0
  %v896 = vadd.f32 0.0, %v895
  %v897 = vpop.f32.mrf.mxu0
  %898 = vmatprep.mubr.f32.mxu0 0.0
  %899 = vmatmul.mubr.f32.gmra.mxu0 %v305
  %v900 = vpop.f32.mrf.mxu0
  %v901 = vadd.f32 0.0, %v900
  %v902 = vpop.f32.mrf.mxu0
  %903 = vmatprep.mubr.f32.mxu0 0.0
  %904 = vmatmul.mubr.f32.gmra.mxu0 %v308
  %v905 = vpop.f32.mrf.mxu0
  %v906 = vadd.f32 0.0, %v905
  %v907 = vpop.f32.mrf.mxu0
  %908 = vmatprep.mubr.f32.mxu0 0.0
  %909 = vmatmul.mubr.f32.gmra.mxu0 %v311
  %v910 = vpop.f32.mrf.mxu0
  %v911 = vadd.f32 0.0, %v910
  %v912 = vpop.f32.mrf.mxu0
  %913 = vmatprep.mubr.f32.mxu0 0.0
  %914 = vmatmul.mubr.f32.gmra.mxu0 %v314
  %v915 = vpop.f32.mrf.mxu0
  %v916 = vadd.f32 0.0, %v915
  %v917 = vpop.f32.mrf.mxu0
  %918 = vmatprep.mubr.f32.mxu0 0.0
  %919 = vmatmul.mubr.f32.gmra.mxu0 %v317
  %v920 = vpop.f32.mrf.mxu0
  %v921 = vadd.f32 0.0, %v920
  %v922 = vpop.f32.mrf.mxu0
  %923 = vmatprep.mubr.f32.mxu0 0.0
  %924 = vmatmul.mubr.f32.gmra.mxu0 %v320
  %v925 = vpop.f32.mrf.mxu0
  %v926 = vadd.f32 0.0, %v925
  %v927 = vpop.f32.mrf.mxu0
  %928 = vmatprep.mubr.f32.mxu0 0.0
  %929 = vmatmul.mubr.f32.gmra.mxu0 %v323
  %v930 = vpop.f32.mrf.mxu0
  %v931 = vadd.f32 0.0, %v930
  %v932 = vpop.f32.mrf.mxu0
  %933 = vmatprep.mubr.f32.mxu0 0.0
  %934 = vmatmul.mubr.f32.gmra.mxu0 %v326
  %v935 = vpop.f32.mrf.mxu0
  %v936 = vadd.f32 0.0, %v935
  %v937 = vpop.f32.mrf.mxu0
  %938 = vmatprep.mubr.f32.mxu0 0.0
  %939 = vmatmul.mubr.f32.gmra.mxu0 %v329
  %v940 = vpop.f32.mrf.mxu0
  %v941 = vadd.f32 0.0, %v940
  %v942 = vpop.f32.mrf.mxu0
  %943 = vmatprep.mubr.f32.mxu0 0.0
  %944 = vmatmul.mubr.f32.gmra.mxu0 %v332
  %v945 = vpop.f32.mrf.mxu0
  %v946 = vadd.f32 0.0, %v945
  %v947 = vpop.f32.mrf.mxu0
  %948 = vmatprep.mubr.f32.mxu0 0.0
  %949 = vmatmul.mubr.f32.gmra.mxu0 %v335
  %v950 = vpop.f32.mrf.mxu0
  %v951 = vadd.f32 0.0, %v950
  %v952 = vpop.f32.mrf.mxu0
  %953 = vmatprep.mubr.f32.mxu0 0.0
  %954 = vmatmul.mubr.f32.gmra.mxu0 %v338
  %v955 = vpop.f32.mrf.mxu0
  %v956 = vadd.f32 0.0, %v955
  %v957 = vpop.f32.mrf.mxu0
  %958 = vmatprep.mubr.f32.mxu0 0.0
  %959 = vmatmul.mubr.f32.gmra.mxu0 %v341
  %v960 = vpop.f32.mrf.mxu0
  %v961 = vadd.f32 0.0, %v960
  %v962 = vpop.f32.mrf.mxu0
  %963 = vmatprep.mubr.f32.mxu0 0.0
  %964 = vmatmul.mubr.f32.gmra.mxu0 %v344
  %v965 = vpop.f32.mrf.mxu0
  %v966 = vadd.f32 0.0, %v965
  %v967 = vpop.f32.mrf.mxu0
  %968 = vmatprep.mubr.f32.mxu0 0.0
  %969 = vmatmul.mubr.f32.gmra.mxu0 %v347
  %v970 = vpop.f32.mrf.mxu0
  %v971 = vadd.f32 0.0, %v970
  %v972 = vpop.f32.mrf.mxu0
  %973 = vmatprep.mubr.f32.mxu0 0.0
  %974 = vmatmul.mubr.f32.gmra.mxu0 %v350
  %v975 = vpop.f32.mrf.mxu0
  %v976 = vadd.f32 0.0, %v975
  %v977 = vpop.f32.mrf.mxu0
  %978 = vmatprep.mubr.f32.mxu0 0.0
  %979 = vmatmul.mubr.f32.gmra.mxu0 %v353
  %v980 = vpop.f32.mrf.mxu0
  %v981 = vadd.f32 0.0, %v980
  %v982 = vpop.f32.mrf.mxu0
  %983 = vmatprep.mubr.f32.mxu0 0.0
  %984 = vmatmul.mubr.f32.gmra.mxu0 %v356
  %v985 = vpop.f32.mrf.mxu0
  %v986 = vadd.f32 0.0, %v985
  %v987 = vpop.f32.mrf.mxu0
  %988 = vmatprep.mubr.f32.mxu0 0.0
  %989 = vmatmul.mubr.f32.gmra.mxu0 %v359
  %v990 = vpop.f32.mrf.mxu0
  %v991 = vadd.f32 0.0, %v990
  %v992 = vpop.f32.mrf.mxu0
  %993 = vmatprep.mubr.f32.mxu0 0.0
  %994 = vmatmul.mubr.f32.gmra.mxu0 %v362
  %v995 = vpop.f32.mrf.mxu0
  %v996 = vadd.f32 0.0, %v995
  %v997 = vpop.f32.mrf.mxu0
  %998 = vmatprep.mubr.f32.mxu0 0.0
  %999 = vmatmul.mubr.f32.gmra.mxu0 %v365
  %v1000 = vpop.f32.mrf.mxu0
  %v1001 = vadd.f32 0.0, %v1000
  %v1002 = vpop.f32.mrf.mxu0
  %1003 = vmatprep.mubr.f32.mxu0 0.0
  %1004 = vmatmul.mubr.f32.gmra.mxu0 %v368
  %v1005 = vpop.f32.mrf.mxu0
  %v1006 = vadd.f32 0.0, %v1005
  %v1007 = vpop.f32.mrf.mxu0
  %1008 = vmatprep.mubr.f32.mxu0 0.0
  %1009 = vmatmul.mubr.f32.gmra.mxu0 %v371
  %v1010 = vpop.f32.mrf.mxu0
  %v1011 = vadd.f32 0.0, %v1010
  %v1012 = vpop.f32.mrf.mxu0
  %1013 = vmatprep.mubr.f32.mxu0 0.0
  %1014 = vmatmul.mubr.f32.gmra.mxu0 %v374
  %v1015 = vpop.f32.mrf.mxu0
  %v1016 = vadd.f32 0.0, %v1015
  %v1017 = vpop.f32.mrf.mxu0
  %1018 = vmatprep.mubr.f32.mxu0 0.0
  %1019 = vmatmul.mubr.f32.gmra.mxu0 %v377
  %v1020 = vpop.f32.mrf.mxu0
  %v1021 = vadd.f32 0.0, %v1020
  %v1022 = vpop.f32.mrf.mxu0
  %1023 = vmatprep.mubr.f32.mxu0 0.0
  %1024 = vmatmul.mubr.f32.gmra.mxu0 %v380
  %v1025 = vpop.f32.mrf.mxu0
  %v1026 = vadd.f32 0.0, %v1025
  %v1027 = vpop.f32.mrf.mxu0
  %1028 = vmatprep.mubr.f32.mxu0 0.0
  %1029 = vmatmul.mubr.f32.gmra.mxu0 %v383
  %v1030 = vpop.f32.mrf.mxu0
  %v1031 = vadd.f32 0.0, %v1030
  %v1032 = vpop.f32.mrf.mxu0
  %1033 = vmatprep.mubr.f32.mxu0 0.0
  %1034 = vmatmul.mubr.f32.gmra.mxu0 %v386
  %v1035 = vpop.f32.mrf.mxu0
  %v1036 = vadd.f32 0.0, %v1035
  %v1037 = vpop.f32.mrf.mxu0
  %1038 = vmatprep.mubr.f32.mxu0 0.0
  %1039 = vmatmul.mubr.f32.gmra.mxu0 %v389
  %v1040 = vpop.f32.mrf.mxu0
  %v1041 = vadd.f32 0.0, %v1040
  %v1042 = vpop.f32.mrf.mxu0
  %1043 = vmatprep.mubr.f32.mxu0 0.0
  %1044 = vmatmul.mubr.f32.gmra.mxu0 %v392
  %v1045 = vpop.f32.mrf.mxu0
  %v1046 = vadd.f32 0.0, %v1045
  %v1047 = vpop.f32.mrf.mxu0
  %1048 = vmatprep.mubr.f32.mxu0 0.0
  %1049 = vmatmul.mubr.f32.gmra.mxu0 %v395
  %v1050 = vpop.f32.mrf.mxu0
  %v1051 = vadd.f32 0.0, %v1050
  %v1052 = vpop.f32.mrf.mxu0
  %1053 = vmatprep.mubr.f32.mxu0 0.0
  %1054 = vmatmul.mubr.f32.gmra.mxu0 %v398
  %v1055 = vpop.f32.mrf.mxu0
  %v1056 = vadd.f32 0.0, %v1055
  %v1057 = vpop.f32.mrf.mxu0
  %1058 = vmatprep.mubr.f32.mxu0 0.0
  %1059 = vmatmul.mubr.f32.gmra.mxu0 %v401
  %v1060 = vpop.f32.mrf.mxu0
  %v1061 = vadd.f32 0.0, %v1060
  %v1062 = vpop.f32.mrf.mxu0
  %1063 = vmatprep.mubr.f32.mxu0 0.0
  %1064 = vmatmul.mubr.f32.gmra.mxu0 %v404
  %v1065 = vpop.f32.mrf.mxu0
  %v1066 = vadd.f32 0.0, %v1065
  %v1067 = vpop.f32.mrf.mxu0
  %1068 = vmatprep.mubr.f32.mxu0 0.0
  %1069 = vmatmul.mubr.f32.gmra.mxu0 %v407
  %v1070 = vpop.f32.mrf.mxu0
  %v1071 = vadd.f32 0.0, %v1070
  %v1072 = vpop.f32.mrf.mxu0
  %1073 = vmatprep.mubr.f32.mxu0 0.0
  %1074 = vmatmul.mubr.f32.gmra.mxu0 %v410
  %v1075 = vpop.f32.mrf.mxu0
  %v1076 = vadd.f32 0.0, %v1075
  %v1077 = vpop.f32.mrf.mxu0
  %1078 = vmatprep.mubr.f32.mxu0 0.0
  %1079 = vmatmul.mubr.f32.gmra.mxu0 %v413
  %v1080 = vpop.f32.mrf.mxu0
  %v1081 = vadd.f32 0.0, %v1080
  %v1082 = vpop.f32.mrf.mxu0
  %1083 = vmatprep.mubr.f32.mxu0 0.0
  %1084 = vmatmul.mubr.f32.gmra.mxu0 %v416
  %v1085 = vpop.f32.mrf.mxu0
  %v1086 = vadd.f32 0.0, %v1085
  %v1087 = vpop.f32.mrf.mxu0
  %1088 = vmatprep.mubr.f32.mxu0 0.0
  %1089 = vmatmul.mubr.f32.gmra.mxu0 %v419
  %v1090 = vpop.f32.mrf.mxu0
  %v1091 = vadd.f32 0.0, %v1090
  %v1092 = vpop.f32.mrf.mxu0
  %1093 = vmatprep.mubr.f32.mxu0 0.0
  %1094 = vmatmul.mubr.f32.gmra.mxu0 %v422
  %v1095 = vpop.f32.mrf.mxu0
  %v1096 = vadd.f32 0.0, %v1095
  %v1097 = vpop.f32.mrf.mxu0
  %1098 = vmatprep.mubr.f32.mxu0 0.0
  %1099 = vmatmul.mubr.f32.gmra.mxu0 %v425
  %v1100 = vpop.f32.mrf.mxu0
  %v1101 = vadd.f32 0.0, %v1100
  %v1102 = vpop.f32.mrf.mxu0
  %1103 = vmatprep.mubr.f32.mxu0 0.0
  %1104 = vmatmul.mubr.f32.gmra.mxu0 %v428
  %v1105 = vpop.f32.mrf.mxu0
  %v1106 = vadd.f32 0.0, %v1105
  %v1107 = vpop.f32.mrf.mxu0
  %1108 = vmatprep.mubr.f32.mxu0 0.0
  %1109 = vmatmul.mubr.f32.gmra.mxu0 %v431
  %v1110 = vpop.f32.mrf.mxu0
  %v1111 = vadd.f32 0.0, %v1110
  %v1112 = vpop.f32.mrf.mxu0
  %1113 = vmatprep.mubr.f32.mxu0 0.0
  %1114 = vmatmul.mubr.f32.gmra.mxu0 %v434
  %v1115 = vpop.f32.mrf.mxu0
  %v1116 = vadd.f32 0.0, %v1115
  %v1117 = vpop.f32.mrf.mxu0
  %1118 = vmatprep.mubr.f32.mxu0 0.0
  %1119 = vmatmul.mubr.f32.gmra.mxu0 %v437
  %v1120 = vpop.f32.mrf.mxu0
  %v1121 = vadd.f32 0.0, %v1120
  %v1122 = vpop.f32.mrf.mxu0
  %1123 = vmatprep.mubr.f32.mxu0 0.0
  %1124 = vmatmul.mubr.f32.gmra.mxu0 %v440
  %v1125 = vpop.f32.mrf.mxu0
  %v1126 = vadd.f32 0.0, %v1125
  %v1127 = vpop.f32.mrf.mxu0
  %1128 = vmatprep.mubr.f32.mxu0 0.0
  %1129 = vmatmul.mubr.f32.gmra.mxu0 %v443
  %v1130 = vpop.f32.mrf.mxu0
  %v1131 = vadd.f32 0.0, %v1130
  %v1132 = vpop.f32.mrf.mxu0
  %1133 = vmatprep.mubr.f32.mxu0 0.0
  %1134 = vmatmul.mubr.f32.gmra.mxu0 %v446
  %v1135 = vpop.f32.mrf.mxu0
  %v1136 = vadd.f32 0.0, %v1135
  %v1137 = vpop.f32.mrf.mxu0
  %1138 = vmatprep.mubr.f32.mxu0 0.0
  %1139 = vmatmul.mubr.f32.gmra.mxu0 %v449
  %v1140 = vpop.f32.mrf.mxu0
  %v1141 = vadd.f32 0.0, %v1140
  %v1142 = vpop.f32.mrf.mxu0
  %1143 = vmatprep.mubr.f32.mxu0 0.0
  %1144 = vmatmul.mubr.f32.gmra.mxu0 %v452
  %v1145 = vpop.f32.mrf.mxu0
  %v1146 = vadd.f32 0.0, %v1145
  %v1147 = vpop.f32.mrf.mxu0
  %1148 = vmatprep.mubr.f32.mxu0 0.0
  %1149 = vmatmul.mubr.f32.gmra.mxu0 %v455
  %v1150 = vpop.f32.mrf.mxu0
  %v1151 = vadd.f32 0.0, %v1150
  %v1152 = vpop.f32.mrf.mxu0
  %1153 = vmatprep.mubr.f32.mxu0 0.0
  %1154 = vmatmul.mubr.f32.gmra.mxu0 %v458
  %v1155 = vpop.f32.mrf.mxu0
  %v1156 = vadd.f32 0.0, %v1155
  %v1157 = vpop.f32.mrf.mxu0
  %1158 = vmatprep.mubr.f32.mxu0 0.0
  %1159 = vmatmul.mubr.f32.gmra.mxu0 %v461
  %v1160 = vpop.f32.mrf.mxu0
  %v1161 = vadd.f32 0.0, %v1160
  %v1162 = vpop.f32.mrf.mxu0
  %1163 = vmatprep.mubr.f32.mxu0 0.0
  %1164 = vmatmul.mubr.f32.gmra.mxu0 %v464
  %v1165 = vpop.f32.mrf.mxu0
  %v1166 = vadd.f32 0.0, %v1165
  %v1167 = vpop.f32.mrf.mxu0
  %1168 = vmatprep.mubr.f32.mxu0 0.0
  %1169 = vmatmul.mubr.f32.gmra.mxu0 %v467
  %v1170 = vpop.f32.mrf.mxu0
  %v1171 = vadd.f32 0.0, %v1170
  %v1172 = vpop.f32.mrf.mxu0
  %1173 = vmatprep.mubr.f32.mxu0 0.0
  %1174 = vmatmul.mubr.f32.gmra.mxu0 %v470
  %v1175 = vpop.f32.mrf.mxu0
  %v1176 = vadd.f32 0.0, %v1175
  %v1177 = vpop.f32.mrf.mxu0
  %1178 = vmatprep.mubr.f32.mxu0 0.0
  %1179 = vmatmul.mubr.f32.gmra.mxu0 %v473
  %v1180 = vpop.f32.mrf.mxu0
  %v1181 = vadd.f32 0.0, %v1180
  %v1182 = vpop.f32.mrf.mxu0
  %1183 = vmatprep.mubr.f32.mxu0 0.0
  %1184 = vmatmul.mubr.f32.gmra.mxu0 %v476
  %v1185 = vpop.f32.mrf.mxu0
  %v1186 = vadd.f32 0.0, %v1185
  %v1187 = vpop.f32.mrf.mxu0
  %1188 = vmatprep.mubr.f32.mxu0 0.0
  %1189 = vmatmul.mubr.f32.gmra.mxu0 %v479
  %v1190 = vpop.f32.mrf.mxu0
  %v1191 = vadd.f32 0.0, %v1190
  %v1192 = vpop.f32.mrf.mxu0
  %1193 = vmatprep.mubr.f32.mxu0 0.0
  %1194 = vmatmul.mubr.f32.gmra.mxu0 %v482
  %v1195 = vpop.f32.mrf.mxu0
  %v1196 = vadd.f32 0.0, %v1195
  %v1197 = vpop.f32.mrf.mxu0
  %1198 = vmatprep.mubr.f32.mxu0 0.0
  %1199 = vmatmul.mubr.f32.gmra.mxu0 %v485
  %v1200 = vpop.f32.mrf.mxu0
  %v1201 = vadd.f32 0.0, %v1200
  %v1202 = vpop.f32.mrf.mxu0
  %1203 = vmatprep.mubr.f32.mxu0 0.0
  %1204 = vmatmul.mubr.f32.gmra.mxu0 %v488
  %v1205 = vpop.f32.mrf.mxu0
  %v1206 = vadd.f32 0.0, %v1205
  %v1207 = vpop.f32.mrf.mxu0
  %1208 = vmatprep.mubr.f32.mxu0 0.0
  %1209 = vmatmul.mubr.f32.gmra.mxu0 %v491
  %v1210 = vpop.f32.mrf.mxu0
  %v1211 = vadd.f32 0.0, %v1210
  %v1212 = vpop.f32.mrf.mxu0
  %1213 = vmatprep.mubr.f32.mxu0 0.0
  %1214 = vmatmul.mubr.f32.gmra.mxu0 %v494
  %v1215 = vpop.f32.mrf.mxu0
  %v1216 = vadd.f32 0.0, %v1215
  %v1217 = vpop.f32.mrf.mxu0
  %1218 = vmatprep.mubr.f32.mxu0 0.0
  %1219 = vmatmul.mubr.f32.gmra.mxu0 %v497
  %v1220 = vpop.f32.mrf.mxu0
  %v1221 = vadd.f32 0.0, %v1220
  %v1222 = vpop.f32.mrf.mxu0
  %1223 = vmatprep.mubr.f32.mxu0 0.0
  %1224 = vmatmul.mubr.f32.gmra.mxu0 %v500
  %v1225 = vpop.f32.mrf.mxu0
  %v1226 = vadd.f32 0.0, %v1225
  %v1227 = vpop.f32.mrf.mxu0
  %1228 = vmatprep.mubr.f32.mxu0 0.0
  %1229 = vmatmul.mubr.f32.gmra.mxu0 %v503
  %v1230 = vpop.f32.mrf.mxu0
  %v1231 = vadd.f32 0.0, %v1230
  %v1232 = vpop.f32.mrf.mxu0
  %1233 = vmatprep.mubr.f32.mxu0 0.0
  %1234 = vmatmul.mubr.f32.gmra.mxu0 %v506
  %v1235 = vpop.f32.mrf.mxu0
  %v1236 = vadd.f32 0.0, %v1235
  %v1237 = vpop.f32.mrf.mxu0
  %1238 = vmatprep.mubr.f32.mxu0 0.0
  %1239 = vmatmul.mubr.f32.gmra.mxu0 %v509
  %v1240 = vpop.f32.mrf.mxu0
  %v1241 = vadd.f32 0.0, %v1240
  %v1242 = vpop.f32.mrf.mxu0
  %1243 = vmatprep.mubr.f32.mxu0 0.0
  %1244 = vmatmul.mubr.f32.gmra.mxu0 %v512
  %v1245 = vpop.f32.mrf.mxu0
  %v1246 = vadd.f32 0.0, %v1245
  %v1247 = vpop.f32.mrf.mxu0
  %1248 = vmatprep.mubr.f32.mxu0 0.0
  %1249 = vmatmul.mubr.f32.gmra.mxu0 %v515
  %v1250 = vpop.f32.mrf.mxu0
  %v1251 = vadd.f32 0.0, %v1250
  %v1252 = vpop.f32.mrf.mxu0
  %1253 = vmatprep.mubr.f32.mxu0 0.0
  %1254 = vmatmul.mubr.f32.gmra.mxu0 %v518
  %v1255 = vpop.f32.mrf.mxu0
  %v1256 = vadd.f32 0.0, %v1255
  %v1257 = vpop.f32.mrf.mxu0
  %1258 = vmatprep.mubr.f32.mxu0 0.0
  %1259 = vmatmul.mubr.f32.gmra.mxu0 %v521
  %v1260 = vpop.f32.mrf.mxu0
  %v1261 = vadd.f32 0.0, %v1260
  %v1262 = vpop.f32.mrf.mxu0
  %1263 = vmatprep.mubr.f32.mxu0 0.0
  %1264 = vmatmul.mubr.f32.gmra.mxu0 %v524
  %v1265 = vpop.f32.mrf.mxu0
  %v1266 = vadd.f32 0.0, %v1265
  %v1267 = vpop.f32.mrf.mxu0
  %1268 = vmatprep.mubr.f32.mxu0 0.0
  %1269 = vmatmul.mubr.f32.gmra.mxu0 %v527
  %v1270 = vpop.f32.mrf.mxu0
  %v1271 = vadd.f32 0.0, %v1270
  %v1272 = vpop.f32.mrf.mxu0
  %1273 = vmatprep.mubr.f32.mxu0 0.0
  %1274 = vmatmul.mubr.f32.gmra.mxu0 %v530
  %v1275 = vpop.f32.mrf.mxu0
  %v1276 = vadd.f32 0.0, %v1275
  %v1277 = vpop.f32.mrf.mxu0
  %1278 = vmatprep.mubr.f32.mxu0 0.0
  %1279 = vmatmul.mubr.f32.gmra.mxu0 %v533
  %v1280 = vpop.f32.mrf.mxu0
  %v1281 = vadd.f32 0.0, %v1280
  %v1282 = vpop.f32.mrf.mxu0
  %1283 = vmatprep.mubr.f32.mxu0 0.0
  %1284 = vmatmul.mubr.f32.gmra.mxu0 %v536
  %v1285 = vpop.f32.mrf.mxu0
  %v1286 = vadd.f32 0.0, %v1285
  %v1287 = vpop.f32.mrf.mxu0
  %1288 = vmatprep.mubr.f32.mxu0 0.0
  %1289 = vmatmul.mubr.f32.gmra.mxu0 %v539
  %v1290 = vpop.f32.mrf.mxu0
  %v1291 = vadd.f32 0.0, %v1290
  %v1292 = vpop.f32.mrf.mxu0
  %1293 = vmatprep.mubr.f32.mxu0 0.0
  %1294 = vmatmul.mubr.f32.gmra.mxu0 %v542
  %v1295 = vpop.f32.mrf.mxu0
  %v1296 = vadd.f32 0.0, %v1295
  %v1297 = vpop.f32.mrf.mxu0
  %1298 = vmatprep.mubr.f32.mxu0 0.0
  %1299 = vmatmul.mubr.f32.gmra.mxu0 %v545
  %v1300 = vpop.f32.mrf.mxu0
  %v1301 = vadd.f32 0.0, %v1300
  %v1302 = vpop.f32.mrf.mxu0
  %1303 = vmatprep.mubr.f32.mxu0 0.0
  %1304 = vmatmul.mubr.f32.gmra.mxu0 %v548
  %v1305 = vpop.f32.mrf.mxu0
  %v1306 = vadd.f32 0.0, %v1305
  %v1307 = vpop.f32.mrf.mxu0
  %1308 = vmatprep.mubr.f32.mxu0 0.0
  %1309 = vmatmul.mubr.f32.gmra.mxu0 %v551
  %v1310 = vpop.f32.mrf.mxu0
  %v1311 = vadd.f32 0.0, %v1310
  %v1312 = vpop.f32.mrf.mxu0
  %1313 = vmatprep.mubr.f32.mxu0 0.0
  %1314 = vmatmul.mubr.f32.gmra.mxu0 %v554
  %v1315 = vpop.f32.mrf.mxu0
  %v1316 = vadd.f32 0.0, %v1315
  %v1317 = vpop.f32.mrf.mxu0
  %1318 = vmatprep.mubr.f32.mxu0 0.0
  %1319 = vmatmul.mubr.f32.gmra.mxu0 %v557
  %v1320 = vpop.f32.mrf.mxu0
  %v1321 = vadd.f32 0.0, %v1320
  %v1322 = vpop.f32.mrf.mxu0
  %1323 = vmatprep.mubr.f32.mxu0 0.0
  %1324 = vmatmul.mubr.f32.gmra.mxu0 %v560
  %v1325 = vpop.f32.mrf.mxu0
  %v1326 = vadd.f32 0.0, %v1325
  %v1327 = vpop.f32.mrf.mxu0
  %1328 = vmatprep.mubr.f32.mxu0 0.0
  %1329 = vmatmul.mubr.f32.gmra.mxu0 %v563
  %v1330 = vpop.f32.mrf.mxu0
  %v1331 = vadd.f32 0.0, %v1330
  %v1332 = vpop.f32.mrf.mxu0
  %1333 = vmatprep.mubr.f32.mxu0 0.0
  %1334 = vmatmul.mubr.f32.gmra.mxu0 %v566
  %v1335 = vpop.f32.mrf.mxu0
  %v1336 = vadd.f32 0.0, %v1335
  %v1337 = vpop.f32.mrf.mxu0
  %1338 = vmatprep.mubr.f32.mxu0 0.0
  %1339 = vmatmul.mubr.f32.gmra.mxu0 %v569
  %v1340 = vpop.f32.mrf.mxu0
  %v1341 = vadd.f32 0.0, %v1340
  %v1342 = vpop.f32.mrf.mxu0
  %1343 = vmatprep.mubr.f32.mxu0 0.0
  %1344 = vmatmul.mubr.f32.gmra.mxu0 %v572
  %v1345 = vpop.f32.mrf.mxu0
  %v1346 = vadd.f32 0.0, %v1345
  %v1347 = vpop.f32.mrf.mxu0
  %1348 = vmatprep.mubr.f32.mxu0 0.0
  %1349 = vmatmul.mubr.f32.gmra.mxu0 %v575
  %v1350 = vpop.f32.mrf.mxu0
  %v1351 = vadd.f32 0.0, %v1350
  %v1352 = vpop.f32.mrf.mxu0
  %1353 = vmatprep.mubr.f32.mxu0 0.0
  %1354 = vmatmul.mubr.f32.gmra.mxu0 %v578
  %v1355 = vpop.f32.mrf.mxu0
  %v1356 = vadd.f32 0.0, %v1355
  %v1357 = vpop.f32.mrf.mxu0
  %1358 = vmatprep.mubr.f32.mxu0 0.0
  %1359 = vmatmul.mubr.f32.gmra.mxu0 %v581
  %v1360 = vpop.f32.mrf.mxu0
  %v1361 = vadd.f32 0.0, %v1360
  %v1362 = vpop.f32.mrf.mxu0
  %1363 = vmatprep.mubr.f32.mxu0 0.0
  %1364 = vmatmul.mubr.f32.gmra.mxu0 %v584
  %v1365 = vpop.f32.mrf.mxu0
  %v1366 = vadd.f32 0.0, %v1365
  %v1367 = vpop.f32.mrf.mxu0
  %1368 = vmatprep.mubr.f32.mxu0 0.0
  %1369 = vmatmul.mubr.f32.gmra.mxu0 %v587
  %v1370 = vpop.f32.mrf.mxu0
  %v1371 = vadd.f32 0.0, %v1370
  %v1372 = vpop.f32.mrf.mxu0
  %1373 = vmatprep.mubr.f32.mxu0 0.0
  %1374 = vmatmul.mubr.f32.gmra.mxu0 %v590
  %v1375 = vpop.f32.mrf.mxu0
  %v1376 = vadd.f32 0.0, %v1375
  %v1377 = vpop.f32.mrf.mxu0
  %1378 = vmatprep.mubr.f32.mxu0 0.0
  %1379 = vmatmul.mubr.f32.gmra.mxu0 %v593
  %v1380 = vpop.f32.mrf.mxu0
  %v1381 = vadd.f32 0.0, %v1380
  %v1382 = vpop.f32.mrf.mxu0
  %1383 = vdwg.mxu0
  %v1384 = vmax.f32 %v666, %v846
  %v1385 = vmax.f32 %v671, %v851
  %v1386 = vmax.f32 %v676, %v856
  %v1387 = vmax.f32 %v681, %v861
  %v1388 = vmax.f32 %v686, %v866
  %v1389 = vmax.f32 %v691, %v871
  %v1390 = vmax.f32 %v696, %v876
  %v1391 = vmax.f32 %v701, %v881
  %v1392 = vmax.f32 %v706, %v886
  %v1393 = vmax.f32 %v711, %v891
  %v1394 = vmax.f32 %v716, %v896
  %v1395 = vmax.f32 %v721, %v901
  %v1396 = vmax.f32 %v726, %v906
  %v1397 = vmax.f32 %v731, %v911
  %v1398 = vmax.f32 %v736, %v916
  %v1399 = vmax.f32 %v741, %v921
  %v1400 = vmax.f32 %v746, %v926
  %v1401 = vmax.f32 %v751, %v931
  %v1402 = vmax.f32 %v756, %v936
  %v1403 = vmax.f32 %v761, %v941
  %v1404 = vmax.f32 %v766, %v946
  %v1405 = vmax.f32 %v771, %v951
  %v1406 = vmax.f32 %v776, %v956
  %v1407 = vmax.f32 %v781, %v961
  %v1408 = vmax.f32 %v786, %v966
  %v1409 = vmax.f32 %v791, %v971
  %v1410 = vmax.f32 %v796, %v976
  %v1411 = vmax.f32 %v801, %v981
  %v1412 = vmax.f32 %v806, %v986
  %v1413 = vmax.f32 %v811, %v991
  %v1414 = vmax.f32 %v816, %v996
  %v1415 = vmax.f32 %v821, %v1001
  %v1416 = vmax.f32 %v826, %v1006
  %v1417 = vmax.f32 %v831, %v1011
  %v1418 = vmax.f32 %v836, %v1016
  %v1419 = vmax.f32 %v841, %v1021
  %v1420 = vmax.f32 %v1384, %v1026
  %v1421 = vmax.f32 %v1385, %v1031
  %v1422 = vmax.f32 %v1386, %v1036
  %v1423 = vmax.f32 %v1387, %v1041
  %v1424 = vmax.f32 %v1388, %v1046
  %v1425 = vmax.f32 %v1389, %v1051
  %v1426 = vmax.f32 %v1390, %v1056
  %v1427 = vmax.f32 %v1391, %v1061
  %v1428 = vmax.f32 %v1392, %v1066
  %v1429 = vmax.f32 %v1393, %v1071
  %v1430 = vmax.f32 %v1394, %v1076
  %v1431 = vmax.f32 %v1395, %v1081
  %v1432 = vmax.f32 %v1396, %v1086
  %v1433 = vmax.f32 %v1397, %v1091
  %v1434 = vmax.f32 %v1398, %v1096
  %v1435 = vmax.f32 %v1399, %v1101
  %v1436 = vmax.f32 %v1400, %v1106
  %v1437 = vmax.f32 %v1401, %v1111
  %v1438 = vmax.f32 %v1402, %v1116
  %v1439 = vmax.f32 %v1403, %v1121
  %v1440 = vmax.f32 %v1404, %v1126
  %v1441 = vmax.f32 %v1405, %v1131
  %v1442 = vmax.f32 %v1406, %v1136
  %v1443 = vmax.f32 %v1407, %v1141
  %v1444 = vmax.f32 %v1408, %v1146
  %v1445 = vmax.f32 %v1409, %v1151
  %v1446 = vmax.f32 %v1410, %v1156
  %v1447 = vmax.f32 %v1411, %v1161
  %v1448 = vmax.f32 %v1412, %v1166
  %v1449 = vmax.f32 %v1413, %v1171
  %v1450 = vmax.f32 %v1414, %v1176
  %v1451 = vmax.f32 %v1415, %v1181
  %v1452 = vmax.f32 %v1416, %v1186
  %v1453 = vmax.f32 %v1417, %v1191
  %v1454 = vmax.f32 %v1418, %v1196
  %v1455 = vmax.f32 %v1419, %v1201
  %v1456 = vmax.f32 %v1420, %v1206
  %v1457 = vmax.f32 %v1421, %v1211
  %v1458 = vmax.f32 %v1422, %v1216
  %v1459 = vmax.f32 %v1423, %v1221
  %v1460 = vmax.f32 %v1424, %v1226
  %v1461 = vmax.f32 %v1425, %v1231
  %v1462 = vmax.f32 %v1426, %v1236
  %v1463 = vmax.f32 %v1427, %v1241
  %v1464 = vmax.f32 %v1428, %v1246
  %v1465 = vmax.f32 %v1429, %v1251
  %v1466 = vmax.f32 %v1430, %v1256
  %v1467 = vmax.f32 %v1431, %v1261
  %v1468 = vmax.f32 %v1432, %v1266
  %v1469 = vmax.f32 %v1433, %v1271
  %v1470 = vmax.f32 %v1434, %v1276
  %v1471 = vmax.f32 %v1435, %v1281
  %v1472 = vmax.f32 %v1436, %v1286
  %v1473 = vmax.f32 %v1437, %v1291
  %v1474 = vmax.f32 %v1438, %v1296
  %v1475 = vmax.f32 %v1439, %v1301
  %v1476 = vmax.f32 %v1440, %v1306
  %v1477 = vmax.f32 %v1441, %v1311
  %v1478 = vmax.f32 %v1442, %v1316
  %v1479 = vmax.f32 %v1443, %v1321
  %v1480 = vmax.f32 %v1444, %v1326
  %v1481 = vmax.f32 %v1445, %v1331
  %v1482 = vmax.f32 %v1446, %v1336
  %v1483 = vmax.f32 %v1447, %v1341
  %v1484 = vmax.f32 %v1448, %v1346
  %v1485 = vmax.f32 %v1449, %v1351
  %v1486 = vmax.f32 %v1450, %v1356
  %v1487 = vmax.f32 %v1451, %v1361
  %v1488 = vmax.f32 %v1452, %v1366
  %v1489 = vmax.f32 %v1453, %v1371
  %v1490 = vmax.f32 %v1454, %v1376
  %v1491 = vmax.f32 %v1455, %v1381
  %v1492 = vld [vmem:[%s2] sm:$0x1]
  %v1494 = vlaneseq
  %v1495 = vshrl.u32 %v1494, 7
  %v1496 = vsub.s32 0, %v1495
  %v1497 = vrot.slane %v1492, %v1496
  %v1499 = vadd.f32 %v1456, %v1497
  %v1500 = vadd.f32 %v1457, %v1497
  %v1501 = vadd.f32 %v1458, %v1497
  %v1502 = vadd.f32 %v1459, %v1497
  %v1503 = vadd.f32 %v1460, %v1497
  %v1504 = vadd.f32 %v1461, %v1497
  %v1505 = vadd.f32 %v1462, %v1497
  %v1506 = vadd.f32 %v1463, %v1497
  %v1507 = vadd.f32 %v1464, %v1497
  %v1508 = vadd.f32 %v1465, %v1497
  %v1509 = vadd.f32 %v1466, %v1497
  %v1510 = vadd.f32 %v1467, %v1497
  %v1511 = vadd.f32 %v1468, %v1497
  %v1512 = vadd.f32 %v1469, %v1497
  %v1513 = vadd.f32 %v1470, %v1497
  %v1514 = vadd.f32 %v1471, %v1497
  %v1515 = vadd.f32 %v1472, %v1497
  %v1516 = vadd.f32 %v1473, %v1497
  %v1517 = vadd.f32 %v1474, %v1497
  %v1518 = vadd.f32 %v1475, %v1497
  %v1519 = vadd.f32 %v1476, %v1497
  %v1520 = vadd.f32 %v1477, %v1497
  %v1521 = vadd.f32 %v1478, %v1497
  %v1522 = vadd.f32 %v1479, %v1497
  %v1523 = vadd.f32 %v1480, %v1497
  %v1524 = vadd.f32 %v1481, %v1497
  %v1525 = vadd.f32 %v1482, %v1497
  %v1526 = vadd.f32 %v1483, %v1497
  %v1527 = vadd.f32 %v1484, %v1497
  %v1528 = vadd.f32 %v1485, %v1497
  %v1529 = vadd.f32 %v1486, %v1497
  %v1530 = vadd.f32 %v1487, %v1497
  %v1531 = vadd.f32 %v1488, %v1497
  %v1532 = vadd.f32 %v1489, %v1497
  %v1533 = vadd.f32 %v1490, %v1497
  %v1534 = vadd.f32 %v1491, %v1497
  %v1535 = vmax.f32 %v1499, 0.0
  %v1536 = vmax.f32 %v1500, 0.0
  %v1537 = vmax.f32 %v1501, 0.0
  %v1538 = vmax.f32 %v1502, 0.0
  %v1539 = vmax.f32 %v1503, 0.0
  %v1540 = vmax.f32 %v1504, 0.0
  %v1541 = vmax.f32 %v1505, 0.0
  %v1542 = vmax.f32 %v1506, 0.0
  %v1543 = vmax.f32 %v1507, 0.0
  %v1544 = vmax.f32 %v1508, 0.0
  %v1545 = vmax.f32 %v1509, 0.0
  %v1546 = vmax.f32 %v1510, 0.0
  %v1547 = vmax.f32 %v1511, 0.0
  %v1548 = vmax.f32 %v1512, 0.0
  %v1549 = vmax.f32 %v1513, 0.0
  %v1550 = vmax.f32 %v1514, 0.0
  %v1551 = vmax.f32 %v1515, 0.0
  %v1552 = vmax.f32 %v1516, 0.0
  %v1553 = vmax.f32 %v1517, 0.0
  %v1554 = vmax.f32 %v1518, 0.0
  %v1555 = vmax.f32 %v1519, 0.0
  %v1556 = vmax.f32 %v1520, 0.0
  %v1557 = vmax.f32 %v1521, 0.0
  %v1558 = vmax.f32 %v1522, 0.0
  %v1559 = vmax.f32 %v1523, 0.0
  %v1560 = vmax.f32 %v1524, 0.0
  %v1561 = vmax.f32 %v1525, 0.0
  %v1562 = vmax.f32 %v1526, 0.0
  %v1563 = vmax.f32 %v1527, 0.0
  %v1564 = vmax.f32 %v1528, 0.0
  %v1565 = vmax.f32 %v1529, 0.0
  %v1566 = vmax.f32 %v1530, 0.0
  %v1567 = vmax.f32 %v1531, 0.0
  %v1568 = vmax.f32 %v1532, 0.0
  %v1569 = vmax.f32 %v1533, 0.0
  %v1570 = vmax.f32 %v1534, 0.0
  %vm1571 = vcmask 130048
  %1572 = vst.msk [vmem:[%s3] sm:$0xff] %vm1571, %v1535
  %1573 = vst.msk [vmem:[%s3 + $0x8] sm:$0xff] %vm1571, %v1536
  %1574 = vst.msk [vmem:[%s3 + $0x10] sm:$0xff] %vm1571, %v1537
  %1575 = vst.msk [vmem:[%s3 + $0x18] sm:$0xff] %vm1571, %v1538
  %1576 = vst.msk [vmem:[%s3 + $0x20] sm:$0xff] %vm1571, %v1539
  %1577 = vst.msk [vmem:[%s3 + $0x28] sm:$0xff] %vm1571, %v1540
  %1578 = vst.msk [vmem:[%s3 + $0x30] sm:$0xff] %vm1571, %v1541
  %1579 = vst.msk [vmem:[%s3 + $0x38] sm:$0xff] %vm1571, %v1542
  %1580 = vst.msk [vmem:[%s3 + $0x40] sm:$0xff] %vm1571, %v1543
  %1581 = vst.msk [vmem:[%s3 + $0x48] sm:$0xff] %vm1571, %v1544
  %1582 = vst.msk [vmem:[%s3 + $0x50] sm:$0xff] %vm1571, %v1545
  %1583 = vst.msk [vmem:[%s3 + $0x58] sm:$0xff] %vm1571, %v1546
  %1584 = vst.msk [vmem:[%s3 + $0x60] sm:$0xff] %vm1571, %v1547
  %1585 = vst.msk [vmem:[%s3 + $0x68] sm:$0xff] %vm1571, %v1548
  %1586 = vst.msk [vmem:[%s3 + $0x70] sm:$0xff] %vm1571, %v1549
  %1587 = vst.msk [vmem:[%s3 + $0x78] sm:$0xff] %vm1571, %v1550
  %1588 = vst.msk [vmem:[%s3 + $0x80] sm:$0xff] %vm1571, %v1551
  %1589 = vst.msk [vmem:[%s3 + $0x88] sm:$0xff] %vm1571, %v1552
  %1590 = vst.msk [vmem:[%s3 + $0x90] sm:$0xff] %vm1571, %v1553
  %1591 = vst.msk [vmem:[%s3 + $0x98] sm:$0xff] %vm1571, %v1554
  %1592 = vst.msk [vmem:[%s3 + $0xa0] sm:$0xff] %vm1571, %v1555
  %1593 = vst.msk [vmem:[%s3 + $0xa8] sm:$0xff] %vm1571, %v1556
  %1594 = vst.msk [vmem:[%s3 + $0xb0] sm:$0xff] %vm1571, %v1557
  %1595 = vst.msk [vmem:[%s3 + $0xb8] sm:$0xff] %vm1571, %v1558
  %1596 = vst.msk [vmem:[%s3 + $0xc0] sm:$0xff] %vm1571, %v1559
  %1597 = vst.msk [vmem:[%s3 + $0xc8] sm:$0xff] %vm1571, %v1560
  %1598 = vst.msk [vmem:[%s3 + $0xd0] sm:$0xff] %vm1571, %v1561
  %1599 = vst.msk [vmem:[%s3 + $0xd8] sm:$0xff] %vm1571, %v1562
  %1600 = vst.msk [vmem:[%s3 + $0xe0] sm:$0xff] %vm1571, %v1563
  %1601 = vst.msk [vmem:[%s3 + $0xe8] sm:$0xff] %vm1571, %v1564
  %1602 = vst.msk [vmem:[%s3 + $0xf0] sm:$0xff] %vm1571, %v1565
  %1603 = vst.msk [vmem:[%s3 + $0xf8] sm:$0xff] %vm1571, %v1566
  %1604 = vst.msk [vmem:[%s3 + $0x100] sm:$0xff] %vm1571, %v1567
  %1605 = vst.msk [vmem:[%s3 + $0x108] sm:$0xff] %vm1571, %v1568
  %1606 = vst.msk [vmem:[%s3 + $0x110] sm:$0xff] %vm1571, %v1569
  %1607 = vst.msk [vmem:[%s3 + $0x118] sm:$0xff] %vm1571, %v1570
  // Predicated region
  $region14: #{lenet_forward.2} parent=0 // pred_check
    _
  $region15: #{lenet_forward.2} parent=0 // pred_check_branch
    %1609 = sbr.rel (0) target = $region17
  $region16: #{lenet_forward.2} parent=0 // pred_region
    _
  $region17: #{lenet_forward.2} parent=0 // pred_fallthru
    _
  // Predicated region
  $region18: #{lenet_forward.2} parent=0 // pred_check
    _
  $region19: #{lenet_forward.2} parent=0 // pred_check_branch
    %1611 = sbr.rel (0) target = $region21
  $region20: #{lenet_forward.2} parent=0 // pred_region
    _
  $region21: #{lenet_forward.2} parent=0 // pred_fallthru
    _

// kernel: lenet_forward.3
$region0: #{lenet_forward.3}
  #allocation0 [shape = 'u32[]', space=smem, size = 0x4, offset = 0x4, fixed_abs, tag = 'smem constant byte address 0x4 - core index']
  #allocation1 [shape = 'u32[144,128]{1,0:T(1,128)}', space=vmem, size = 0x12000, scoped, tag = 'internal scratch']
  %s0 = inlined_call_operand.vmem [shape: f32[2,2304], index: 0, kind: input, shape index: {}]
  %s1 = inlined_call_operand.vmem [shape: f32[2304,120], index: 1, kind: input, shape index: {}]
  %s2 = inlined_call_operand.vmem [shape: f32[1,120], index: 2, kind: input, shape index: {}]
  %s3 = inlined_call_operand.vmem [shape: f32[120,10], index: 3, kind: input, shape index: {}]
  %s4 = inlined_call_operand.vmem [shape: f32[1,10], index: 4, kind: input, shape index: {}]
  %s5 = inlined_call_operand.hbm [shape: f32[2,10], index: 5, kind: output, shape index: {}]
  %s6 = sld [smem:[#allocation0]]
  $region30: #{lenet_forward.3} parent=0
    _
  %s8 = ssub.s32 1, %s6
  %s9 = scalar_select 0, %s8, %s6
  $region1: #{lenet_forward.3} parent=0
    #allocation2 [shape = 'u8[1024]{0}', space=vmem, size = 0x400, scoped, tag = 'output window, operand 0, single buffered']
    #allocation3 [shape = 's32[1]{0}', space=sflag, size = 0x4, scoped, tag = 'scoped memory for lenet_forward.3']
    %10 = vsyncpa [#allocation3], 0
    // Predicated region
    $region2: #{lenet_forward.3} parent=1 // pred_check
      _
    $region3: #{lenet_forward.3} parent=1 // pred_check_branch
      %12 = sbr.rel (0) target = $region5
    $region4: #{lenet_forward.3} parent=1 // pred_region
      _
    $region5: #{lenet_forward.3} parent=1 // pred_fallthru
      _
    // Predicated region
    $region6: #{lenet_forward.3} parent=1 // pred_check
      _
    $region7: #{lenet_forward.3} parent=1 // pred_check_branch
      %14 = sbr.rel (0) target = $region9
    $region8: #{lenet_forward.3} parent=1 // pred_region
      _
    $region9: #{lenet_forward.3} parent=1 // pred_fallthru
      _
    // Predicated region
    $region10: #{lenet_forward.3} parent=1 // pred_check
      _
    $region11: #{lenet_forward.3} parent=1 // pred_check_branch
      %16 = sbr.rel (0) target = $region13
    $region12: #{lenet_forward.3} parent=1 // pred_region
      _
    $region13: #{lenet_forward.3} parent=1 // pred_fallthru
      _
    // Predicated region
    $region14: #{lenet_forward.3} parent=1 // pred_check
      _
    $region15: #{lenet_forward.3} parent=1 // pred_check_branch
      %18 = sbr.rel (0) target = $region17
    $region16: #{lenet_forward.3} parent=1 // pred_region
      _
    $region17: #{lenet_forward.3} parent=1 // pred_fallthru
      _
    // Predicated region
    $region18: #{lenet_forward.3} parent=1 // pred_check
      _
    $region19: #{lenet_forward.3} parent=1 // pred_check_branch
      %20 = sbr.rel (0) target = $region21
    $region20: #{lenet_forward.3} parent=1 // pred_region
      _
    $region21: #{lenet_forward.3} parent=1 // pred_fallthru
      _
    %v21 = vld [vmem:[%s0] sm:$0xff]
    %v22 = vld [vmem:[%s0 + $0x8] sm:$0xff]
    %v23 = vld [vmem:[%s0 + $0x10] sm:$0xff]
    %v24 = vld [vmem:[%s0 + $0x18] sm:$0xff]
    %v25 = vld [vmem:[%s0 + $0x20] sm:$0xf]
    %v26 = vld [vmem:[%s1] sm:$0xff]
    %v27 = vld [vmem:[%s1 + $0x8] sm:$0xff]
    %v28 = vld [vmem:[%s1 + $0x10] sm:$0xff]
    %v29 = vld [vmem:[%s1 + $0x18] sm:$0xff]
    %v30 = vld [vmem:[%s1 + $0x20] sm:$0xff]
    %v31 = vld [vmem:[%s1 + $0x28] sm:$0xff]
    %v32 = vld [vmem:[%s1 + $0x30] sm:$0xff]
    %v33 = vld [vmem:[%s1 + $0x38] sm:$0xff]
    %v34 = vld [vmem:[%s1 + $0x40] sm:$0xff]
    %v35 = vld [vmem:[%s1 + $0x48] sm:$0xff]
    %v36 = vld [vmem:[%s1 + $0x50] sm:$0xff]
    %v37 = vld [vmem:[%s1 + $0x58] sm:$0xff]
    %v38 = vld [vmem:[%s1 + $0x60] sm:$0xff]
    %v39 = vld [vmem:[%s1 + $0x68] sm:$0xff]
    %v40 = vld [vmem:[%s1 + $0x70] sm:$0xff]
    %v41 = vld [vmem:[%s1 + $0x78] sm:$0xff]
    %v42 = vld [vmem:[%s1 + $0x80] sm:$0xff]
    %v43 = vld [vmem:[%s1 + $0x88] sm:$0xff]
    %v44 = vld [vmem:[%s1 + $0x90] sm:$0xff]
    %v45 = vld [vmem:[%s1 + $0x98] sm:$0xff]
    %v46 = vld [vmem:[%s1 + $0xa0] sm:$0xff]
    %v47 = vld [vmem:[%s1 + $0xa8] sm:$0xff]
    %v48 = vld [vmem:[%s1 + $0xb0] sm:$0xff]
    %v49 = vld [vmem:[%s1 + $0xb8] sm:$0xff]
    %v50 = vld [vmem:[%s1 + $0xc0] sm:$0xff]
    %v51 = vld [vmem:[%s1 + $0xc8] sm:$0xff]
    %v52 = vld [vmem:[%s1 + $0xd0] sm:$0xff]
    %v53 = vld [vmem:[%s1 + $0xd8] sm:$0xff]
    %v54 = vld [vmem:[%s1 + $0xe0] sm:$0xff]
    %v55 = vld [vmem:[%s1 + $0xe8] sm:$0xff]
    %v56 = vld [vmem:[%s1 + $0xf0] sm:$0xff]
    %v57 = vld [vmem:[%s1 + $0xf8] sm:$0xff]
    %v58 = vld [vmem:[%s1 + $0x100] sm:$0xff]
    %v59 = vld [vmem:[%s1 + $0x108] sm:$0xff]
    %v60 = vld [vmem:[%s1 + $0x110] sm:$0xff]
    %v61 = vld [vmem:[%s1 + $0x118] sm:$0xff]
    %v62 = vld [vmem:[%s1 + $0x120] sm:$0xff]
    %v63 = vld [vmem:[%s1 + $0x128] sm:$0xff]
    %v64 = vld [vmem:[%s1 + $0x130] sm:$0xff]
    %v65 = vld [vmem:[%s1 + $0x138] sm:$0xff]
    %v66 = vld [vmem:[%s1 + $0x140] sm:$0xff]
    %v67 = vld [vmem:[%s1 + $0x148] sm:$0xff]
    %v68 = vld [vmem:[%s1 + $0x150] sm:$0xff]
    %v69 = vld [vmem:[%s1 + $0x158] sm:$0xff]
    %v70 = vld [vmem:[%s1 + $0x160] sm:$0xff]
    %v71 = vld [vmem:[%s1 + $0x168] sm:$0xff]
    %v72 = vld [vmem:[%s1 + $0x170] sm:$0xff]
    %v73 = vld [vmem:[%s1 + $0x178] sm:$0xff]
    %v74 = vld [vmem:[%s1 + $0x180] sm:$0xff]
    %v75 = vld [vmem:[%s1 + $0x188] sm:$0xff]
    %v76 = vld [vmem:[%s1 + $0x190] sm:$0xff]
    %v77 = vld [vmem:[%s1 + $0x198] sm:$0xff]
    %v78 = vld [vmem:[%s1 + $0x1a0] sm:$0xff]
    %v79 = vld [vmem:[%s1 + $0x1a8] sm:$0xff]
    %v80 = vld [vmem:[%s1 + $0x1b0] sm:$0xff]
    %v81 = vld [vmem:[%s1 + $0x1b8] sm:$0xff]
    %v82 = vld [vmem:[%s1 + $0x1c0] sm:$0xff]
    %v83 = vld [vmem:[%s1 + $0x1c8] sm:$0xff]
    %v84 = vld [vmem:[%s1 + $0x1d0] sm:$0xff]
    %v85 = vld [vmem:[%s1 + $0x1d8] sm:$0xff]
    %v86 = vld [vmem:[%s1 + $0x1e0] sm:$0xff]
    %v87 = vld [vmem:[%s1 + $0x1e8] sm:$0xff]
    %v88 = vld [vmem:[%s1 + $0x1f0] sm:$0xff]
    %v89 = vld [vmem:[%s1 + $0x1f8] sm:$0xff]
    %v90 = vld [vmem:[%s1 + $0x200] sm:$0xff]
    %v91 = vld [vmem:[%s1 + $0x208] sm:$0xff]
    %v92 = vld [vmem:[%s1 + $0x210] sm:$0xff]
    %v93 = vld [vmem:[%s1 + $0x218] sm:$0xff]
    %v94 = vld [vmem:[%s1 + $0x220] sm:$0xff]
    %v95 = vld [vmem:[%s1 + $0x228] sm:$0xff]
    %v96 = vld [vmem:[%s1 + $0x230] sm:$0xff]
    %v97 = vld [vmem:[%s1 + $0x238] sm:$0xff]
    %v98 = vld [vmem:[%s1 + $0x240] sm:$0xff]
    %v99 = vld [vmem:[%s1 + $0x248] sm:$0xff]
    %v100 = vld [vmem:[%s1 + $0x250] sm:$0xff]
    %v101 = vld [vmem:[%s1 + $0x258] sm:$0xff]
    %v102 = vld [vmem:[%s1 + $0x260] sm:$0xff]
    %v103 = vld [vmem:[%s1 + $0x268] sm:$0xff]
    %v104 = vld [vmem:[%s1 + $0x270] sm:$0xff]
    %v105 = vld [vmem:[%s1 + $0x278] sm:$0xff]
    %v106 = vld [vmem:[%s1 + $0x280] sm:$0xff]
    %v107 = vld [vmem:[%s1 + $0x288] sm:$0xff]
    %v108 = vld [vmem:[%s1 + $0x290] sm:$0xff]
    %v109 = vld [vmem:[%s1 + $0x298] sm:$0xff]
    %v110 = vld [vmem:[%s1 + $0x2a0] sm:$0xff]
    %v111 = vld [vmem:[%s1 + $0x2a8] sm:$0xff]
    %v112 = vld [vmem:[%s1 + $0x2b0] sm:$0xff]
    %v113 = vld [vmem:[%s1 + $0x2b8] sm:$0xff]
    %v114 = vld [vmem:[%s1 + $0x2c0] sm:$0xff]
    %v115 = vld [vmem:[%s1 + $0x2c8] sm:$0xff]
    %v116 = vld [vmem:[%s1 + $0x2d0] sm:$0xff]
    %v117 = vld [vmem:[%s1 + $0x2d8] sm:$0xff]
    %v118 = vld [vmem:[%s1 + $0x2e0] sm:$0xff]
    %v119 = vld [vmem:[%s1 + $0x2e8] sm:$0xff]
    %v120 = vld [vmem:[%s1 + $0x2f0] sm:$0xff]
    %v121 = vld [vmem:[%s1 + $0x2f8] sm:$0xff]
    %v122 = vld [vmem:[%s1 + $0x300] sm:$0xff]
    %v123 = vld [vmem:[%s1 + $0x308] sm:$0xff]
    %v124 = vld [vmem:[%s1 + $0x310] sm:$0xff]
    %v125 = vld [vmem:[%s1 + $0x318] sm:$0xff]
    %v126 = vld [vmem:[%s1 + $0x320] sm:$0xff]
    %v127 = vld [vmem:[%s1 + $0x328] sm:$0xff]
    %v128 = vld [vmem:[%s1 + $0x330] sm:$0xff]
    %v129 = vld [vmem:[%s1 + $0x338] sm:$0xff]
    %v130 = vld [vmem:[%s1 + $0x340] sm:$0xff]
    %v131 = vld [vmem:[%s1 + $0x348] sm:$0xff]
    %v132 = vld [vmem:[%s1 + $0x350] sm:$0xff]
    %v133 = vld [vmem:[%s1 + $0x358] sm:$0xff]
    %v134 = vld [vmem:[%s1 + $0x360] sm:$0xff]
    %v135 = vld [vmem:[%s1 + $0x368] sm:$0xff]
    %v136 = vld [vmem:[%s1 + $0x370] sm:$0xff]
    %v137 = vld [vmem:[%s1 + $0x378] sm:$0xff]
    %v138 = vld [vmem:[%s1 + $0x380] sm:$0xff]
    %v139 = vld [vmem:[%s1 + $0x388] sm:$0xff]
    %v140 = vld [vmem:[%s1 + $0x390] sm:$0xff]
    %v141 = vld [vmem:[%s1 + $0x398] sm:$0xff]
    %v142 = vld [vmem:[%s1 + $0x3a0] sm:$0xff]
    %v143 = vld [vmem:[%s1 + $0x3a8] sm:$0xff]
    %v144 = vld [vmem:[%s1 + $0x3b0] sm:$0xff]
    %v145 = vld [vmem:[%s1 + $0x3b8] sm:$0xff]
    %v146 = vld [vmem:[%s1 + $0x3c0] sm:$0xff]
    %v147 = vld [vmem:[%s1 + $0x3c8] sm:$0xff]
    %v148 = vld [vmem:[%s1 + $0x3d0] sm:$0xff]
    %v149 = vld [vmem:[%s1 + $0x3d8] sm:$0xff]
    %v150 = vld [vmem:[%s1 + $0x3e0] sm:$0xff]
    %v151 = vld [vmem:[%s1 + $0x3e8] sm:$0xff]
    %v152 = vld [vmem:[%s1 + $0x3f0] sm:$0xff]
    %v153 = vld [vmem:[%s1 + $0x3f8] sm:$0xff]
    %v154 = vld [vmem:[%s1 + $0x400] sm:$0xff]
    %v155 = vld [vmem:[%s1 + $0x408] sm:$0xff]
    %v156 = vld [vmem:[%s1 + $0x410] sm:$0xff]
    %v157 = vld [vmem:[%s1 + $0x418] sm:$0xff]
    %v158 = vld [vmem:[%s1 + $0x420] sm:$0xff]
    %v159 = vld [vmem:[%s1 + $0x428] sm:$0xff]
    %v160 = vld [vmem:[%s1 + $0x430] sm:$0xff]
    %v161 = vld [vmem:[%s1 + $0x438] sm:$0xff]
    %v162 = vld [vmem:[%s1 + $0x440] sm:$0xff]
    %v163 = vld [vmem:[%s1 + $0x448] sm:$0xff]
    %v164 = vld [vmem:[%s1 + $0x450] sm:$0xff]
    %v165 = vld [vmem:[%s1 + $0x458] sm:$0xff]
    %v166 = vld [vmem:[%s1 + $0x460] sm:$0xff]
    %v167 = vld [vmem:[%s1 + $0x468] sm:$0xff]
    %v168 = vld [vmem:[%s1 + $0x470] sm:$0xff]
    %v169 = vld [vmem:[%s1 + $0x478] sm:$0xff]
    %v170 = vld [vmem:[%s1 + $0x480] sm:$0xff]
    %v171 = vld [vmem:[%s1 + $0x488] sm:$0xff]
    %v172 = vld [vmem:[%s1 + $0x490] sm:$0xff]
    %v173 = vld [vmem:[%s1 + $0x498] sm:$0xff]
    %v174 = vld [vmem:[%s1 + $0x4a0] sm:$0xff]
    %v175 = vld [vmem:[%s1 + $0x4a8] sm:$0xff]
    %v176 = vld [vmem:[%s1 + $0x4b0] sm:$0xff]
    %v177 = vld [vmem:[%s1 + $0x4b8] sm:$0xff]
    %v178 = vld [vmem:[%s1 + $0x4c0] sm:$0xff]
    %v179 = vld [vmem:[%s1 + $0x4c8] sm:$0xff]
    %v180 = vld [vmem:[%s1 + $0x4d0] sm:$0xff]
    %v181 = vld [vmem:[%s1 + $0x4d8] sm:$0xff]
    %v182 = vld [vmem:[%s1 + $0x4e0] sm:$0xff]
    %v183 = vld [vmem:[%s1 + $0x4e8] sm:$0xff]
    %v184 = vld [vmem:[%s1 + $0x4f0] sm:$0xff]
    %v185 = vld [vmem:[%s1 + $0x4f8] sm:$0xff]
    %v186 = vld [vmem:[%s1 + $0x500] sm:$0xff]
    %v187 = vld [vmem:[%s1 + $0x508] sm:$0xff]
    %v188 = vld [vmem:[%s1 + $0x510] sm:$0xff]
    %v189 = vld [vmem:[%s1 + $0x518] sm:$0xff]
    %v190 = vld [vmem:[%s1 + $0x520] sm:$0xff]
    %v191 = vld [vmem:[%s1 + $0x528] sm:$0xff]
    %v192 = vld [vmem:[%s1 + $0x530] sm:$0xff]
    %v193 = vld [vmem:[%s1 + $0x538] sm:$0xff]
    %v194 = vld [vmem:[%s1 + $0x540] sm:$0xff]
    %v195 = vld [vmem:[%s1 + $0x548] sm:$0xff]
    %v196 = vld [vmem:[%s1 + $0x550] sm:$0xff]
    %v197 = vld [vmem:[%s1 + $0x558] sm:$0xff]
    %v198 = vld [vmem:[%s1 + $0x560] sm:$0xff]
    %v199 = vld [vmem:[%s1 + $0x568] sm:$0xff]
    %v200 = vld [vmem:[%s1 + $0x570] sm:$0xff]
    %v201 = vld [vmem:[%s1 + $0x578] sm:$0xff]
    %v202 = vld [vmem:[%s1 + $0x580] sm:$0xff]
    %v203 = vld [vmem:[%s1 + $0x588] sm:$0xff]
    %v204 = vld [vmem:[%s1 + $0x590] sm:$0xff]
    %v205 = vld [vmem:[%s1 + $0x598] sm:$0xff]
    %v206 = vld [vmem:[%s1 + $0x5a0] sm:$0xff]
    %v207 = vld [vmem:[%s1 + $0x5a8] sm:$0xff]
    %v208 = vld [vmem:[%s1 + $0x5b0] sm:$0xff]
    %v209 = vld [vmem:[%s1 + $0x5b8] sm:$0xff]
    %v210 = vld [vmem:[%s1 + $0x5c0] sm:$0xff]
    %v211 = vld [vmem:[%s1 + $0x5c8] sm:$0xff]
    %v212 = vld [vmem:[%s1 + $0x5d0] sm:$0xff]
    %v213 = vld [vmem:[%s1 + $0x5d8] sm:$0xff]
    %v214 = vld [vmem:[%s1 + $0x5e0] sm:$0xff]
    %v215 = vld [vmem:[%s1 + $0x5e8] sm:$0xff]
    %v216 = vld [vmem:[%s1 + $0x5f0] sm:$0xff]
    %v217 = vld [vmem:[%s1 + $0x5f8] sm:$0xff]
    %v218 = vld [vmem:[%s1 + $0x600] sm:$0xff]
    %v219 = vld [vmem:[%s1 + $0x608] sm:$0xff]
    %v220 = vld [vmem:[%s1 + $0x610] sm:$0xff]
    %v221 = vld [vmem:[%s1 + $0x618] sm:$0xff]
    %v222 = vld [vmem:[%s1 + $0x620] sm:$0xff]
    %v223 = vld [vmem:[%s1 + $0x628] sm:$0xff]
    %v224 = vld [vmem:[%s1 + $0x630] sm:$0xff]
    %v225 = vld [vmem:[%s1 + $0x638] sm:$0xff]
    %v226 = vld [vmem:[%s1 + $0x640] sm:$0xff]
    %v227 = vld [vmem:[%s1 + $0x648] sm:$0xff]
    %v228 = vld [vmem:[%s1 + $0x650] sm:$0xff]
    %v229 = vld [vmem:[%s1 + $0x658] sm:$0xff]
    %v230 = vld [vmem:[%s1 + $0x660] sm:$0xff]
    %v231 = vld [vmem:[%s1 + $0x668] sm:$0xff]
    %v232 = vld [vmem:[%s1 + $0x670] sm:$0xff]
    %v233 = vld [vmem:[%s1 + $0x678] sm:$0xff]
    %v234 = vld [vmem:[%s1 + $0x680] sm:$0xff]
    %v235 = vld [vmem:[%s1 + $0x688] sm:$0xff]
    %v236 = vld [vmem:[%s1 + $0x690] sm:$0xff]
    %v237 = vld [vmem:[%s1 + $0x698] sm:$0xff]
    %v238 = vld [vmem:[%s1 + $0x6a0] sm:$0xff]
    %v239 = vld [vmem:[%s1 + $0x6a8] sm:$0xff]
    %v240 = vld [vmem:[%s1 + $0x6b0] sm:$0xff]
    %v241 = vld [vmem:[%s1 + $0x6b8] sm:$0xff]
    %v242 = vld [vmem:[%s1 + $0x6c0] sm:$0xff]
    %v243 = vld [vmem:[%s1 + $0x6c8] sm:$0xff]
    %v244 = vld [vmem:[%s1 + $0x6d0] sm:$0xff]
    %v245 = vld [vmem:[%s1 + $0x6d8] sm:$0xff]
    %v246 = vld [vmem:[%s1 + $0x6e0] sm:$0xff]
    %v247 = vld [vmem:[%s1 + $0x6e8] sm:$0xff]
    %v248 = vld [vmem:[%s1 + $0x6f0] sm:$0xff]
    %v249 = vld [vmem:[%s1 + $0x6f8] sm:$0xff]
    %v250 = vld [vmem:[%s1 + $0x700] sm:$0xff]
    %v251 = vld [vmem:[%s1 + $0x708] sm:$0xff]
    %v252 = vld [vmem:[%s1 + $0x710] sm:$0xff]
    %v253 = vld [vmem:[%s1 + $0x718] sm:$0xff]
    %v254 = vld [vmem:[%s1 + $0x720] sm:$0xff]
    %v255 = vld [vmem:[%s1 + $0x728] sm:$0xff]
    %v256 = vld [vmem:[%s1 + $0x730] sm:$0xff]
    %v257 = vld [vmem:[%s1 + $0x738] sm:$0xff]
    %v258 = vld [vmem:[%s1 + $0x740] sm:$0xff]
    %v259 = vld [vmem:[%s1 + $0x748] sm:$0xff]
    %v260 = vld [vmem:[%s1 + $0x750] sm:$0xff]
    %v261 = vld [vmem:[%s1 + $0x758] sm:$0xff]
    %v262 = vld [vmem:[%s1 + $0x760] sm:$0xff]
    %v263 = vld [vmem:[%s1 + $0x768] sm:$0xff]
    %v264 = vld [vmem:[%s1 + $0x770] sm:$0xff]
    %v265 = vld [vmem:[%s1 + $0x778] sm:$0xff]
    %v266 = vld [vmem:[%s1 + $0x780] sm:$0xff]
    %v267 = vld [vmem:[%s1 + $0x788] sm:$0xff]
    %v268 = vld [vmem:[%s1 + $0x790] sm:$0xff]
    %v269 = vld [vmem:[%s1 + $0x798] sm:$0xff]
    %v270 = vld [vmem:[%s1 + $0x7a0] sm:$0xff]
    %v271 = vld [vmem:[%s1 + $0x7a8] sm:$0xff]
    %v272 = vld [vmem:[%s1 + $0x7b0] sm:$0xff]
    %v273 = vld [vmem:[%s1 + $0x7b8] sm:$0xff]
    %v274 = vld [vmem:[%s1 + $0x7c0] sm:$0xff]
    %v275 = vld [vmem:[%s1 + $0x7c8] sm:$0xff]
    %v276 = vld [vmem:[%s1 + $0x7d0] sm:$0xff]
    %v277 = vld [vmem:[%s1 + $0x7d8] sm:$0xff]
    %v278 = vld [vmem:[%s1 + $0x7e0] sm:$0xff]
    %v279 = vld [vmem:[%s1 + $0x7e8] sm:$0xff]
    %v280 = vld [vmem:[%s1 + $0x7f0] sm:$0xff]
    %v281 = vld [vmem:[%s1 + $0x7f8] sm:$0xff]
    %v282 = vld [vmem:[%s1 + $0x800] sm:$0xff]
    %v283 = vld [vmem:[%s1 + $0x808] sm:$0xff]
    %v284 = vld [vmem:[%s1 + $0x810] sm:$0xff]
    %v285 = vld [vmem:[%s1 + $0x818] sm:$0xff]
    %v286 = vld [vmem:[%s1 + $0x820] sm:$0xff]
    %v287 = vld [vmem:[%s1 + $0x828] sm:$0xff]
    %v288 = vld [vmem:[%s1 + $0x830] sm:$0xff]
    %v289 = vld [vmem:[%s1 + $0x838] sm:$0xff]
    %v290 = vld [vmem:[%s1 + $0x840] sm:$0xff]
    %v291 = vld [vmem:[%s1 + $0x848] sm:$0xff]
    %v292 = vld [vmem:[%s1 + $0x850] sm:$0xff]
    %v293 = vld [vmem:[%s1 + $0x858] sm:$0xff]
    %v294 = vld [vmem:[%s1 + $0x860] sm:$0xff]
    %v295 = vld [vmem:[%s1 + $0x868] sm:$0xff]
    %v296 = vld [vmem:[%s1 + $0x870] sm:$0xff]
    %v297 = vld [vmem:[%s1 + $0x878] sm:$0xff]
    %v298 = vld [vmem:[%s1 + $0x880] sm:$0xff]
    %v299 = vld [vmem:[%s1 + $0x888] sm:$0xff]
    %v300 = vld [vmem:[%s1 + $0x890] sm:$0xff]
    %v301 = vld [vmem:[%s1 + $0x898] sm:$0xff]
    %v302 = vld [vmem:[%s1 + $0x8a0] sm:$0xff]
    %v303 = vld [vmem:[%s1 + $0x8a8] sm:$0xff]
    %v304 = vld [vmem:[%s1 + $0x8b0] sm:$0xff]
    %v305 = vld [vmem:[%s1 + $0x8b8] sm:$0xff]
    %v306 = vld [vmem:[%s1 + $0x8c0] sm:$0xff]
    %v307 = vld [vmem:[%s1 + $0x8c8] sm:$0xff]
    %v308 = vld [vmem:[%s1 + $0x8d0] sm:$0xff]
    %v309 = vld [vmem:[%s1 + $0x8d8] sm:$0xff]
    %v310 = vld [vmem:[%s1 + $0x8e0] sm:$0xff]
    %v311 = vld [vmem:[%s1 + $0x8e8] sm:$0xff]
    %v312 = vld [vmem:[%s1 + $0x8f0] sm:$0xff]
    %v313 = vld [vmem:[%s1 + $0x8f8] sm:$0xff]
    %v314 = vld [vmem:[%s2] sm:$0x1]
    %v316 = vlaneseq
    %v317 = vshrl.u32 %v316, 7
    %v318 = vsub.s32 0, %v317
    %v319 = vrot.slane %v314, %v318
    %v326 = vcombine.high %v21, %v21
    %v328 = vunpack.c.l.s4 1983009808
    %v329 = vunpack.c.0.s8 %v328
    %v330 = vlaneseq
    %v331 = vshrl.u32 %v330, 7
    %v332 = vsub.s32 %v329, %v331
    %v333 = vrot.slane %v21, %v332
    %v335 = vunpack.c.l.s4 1983009808
    %v336 = vunpack.c.0.s8 %v335
    %v337 = vlaneseq
    %v338 = vshrl.u32 %v337, 7
    %v339 = vsub.s32 %v336, %v338
    %v340 = vrot.slane %v326, %v339
    %v341 = vcombine.high %v333, %v333
    %v342 = vcombine.high %v340, %v340
    %v343 = vcombine.high %v22, %v22
    %v345 = vunpack.c.l.s4 1983009808
    %v346 = vunpack.c.0.s8 %v345
    %v347 = vlaneseq
    %v348 = vshrl.u32 %v347, 7
    %v349 = vsub.s32 %v346, %v348
    %v350 = vrot.slane %v22, %v349
    %v352 = vunpack.c.l.s4 1983009808
    %v353 = vunpack.c.0.s8 %v352
    %v354 = vlaneseq
    %v355 = vshrl.u32 %v354, 7
    %v356 = vsub.s32 %v353, %v355
    %v357 = vrot.slane %v343, %v356
    %v358 = vcombine.high %v350, %v350
    %v359 = vcombine.high %v357, %v357
    %v360 = vcombine.high %v23, %v23
    %v362 = vunpack.c.l.s4 1983009808
    %v363 = vunpack.c.0.s8 %v362
    %v364 = vlaneseq
    %v365 = vshrl.u32 %v364, 7
    %v366 = vsub.s32 %v363, %v365
    %v367 = vrot.slane %v23, %v366
    %v369 = vunpack.c.l.s4 1983009808
    %v370 = vunpack.c.0.s8 %v369
    %v371 = vlaneseq
    %v372 = vshrl.u32 %v371, 7
    %v373 = vsub.s32 %v370, %v372
    %v374 = vrot.slane %v360, %v373
    %v375 = vcombine.high %v367, %v367
    %v376 = vcombine.high %v374, %v374
    %v377 = vcombine.high %v24, %v24
    %v379 = vunpack.c.l.s4 1983009808
    %v380 = vunpack.c.0.s8 %v379
    %v381 = vlaneseq
    %v382 = vshrl.u32 %v381, 7
    %v383 = vsub.s32 %v380, %v382
    %v384 = vrot.slane %v24, %v383
    %v386 = vunpack.c.l.s4 1983009808
    %v387 = vunpack.c.0.s8 %v386
    %v388 = vlaneseq
    %v389 = vshrl.u32 %v388, 7
    %v390 = vsub.s32 %v387, %v389
    %v391 = vrot.slane %v377, %v390
    %v392 = vcombine.high %v384, %v384
    %v393 = vcombine.high %v391, %v391
    %v395 = vunpack.c.l.s4 1983009808
    %v396 = vunpack.c.0.s8 %v395
    %v397 = vlaneseq
    %v398 = vshrl.u32 %v397, 7
    %v399 = vsub.s32 %v396, %v398
    %v400 = vrot.slane %v25, %v399
    %v401 = vcombine.high %v400, %v400
    %420 = vmatprep.subr.mxu0 0.0
    %421 = vmatpush1.msra.mxu0 %v41
    %422 = vmatprep.subr.mxu0 0.0
    %423 = vmatpush1.msra.mxu0 %v40
    %424 = vmatprep.subr.mxu0 0.0
    %425 = vmatpush1.msra.mxu0 %v39
    %426 = vmatprep.subr.mxu0 0.0
    %427 = vmatpush1.msra.mxu0 %v38
    %428 = vmatprep.subr.mxu0 0.0
    %429 = vmatpush1.msra.mxu0 %v37
    %430 = vmatprep.subr.mxu0 0.0
    %431 = vmatpush1.msra.mxu0 %v36
    %432 = vmatprep.subr.mxu0 0.0
    %433 = vmatpush1.msra.mxu0 %v35
    %434 = vmatprep.subr.mxu0 0.0
    %435 = vmatpush1.msra.mxu0 %v34
    %436 = vmatprep.subr.mxu0 0.0
    %437 = vmatpush1.msra.mxu0 %v33
    %438 = vmatprep.subr.mxu0 0.0
    %439 = vmatpush1.msra.mxu0 %v32
    %440 = vmatprep.subr.mxu0 0.0
    %441 = vmatpush1.msra.mxu0 %v31
    %442 = vmatprep.subr.mxu0 0.0
    %443 = vmatpush1.msra.mxu0 %v30
    %444 = vmatprep.subr.mxu0 0.0
    %445 = vmatpush1.msra.mxu0 %v29
    %446 = vmatprep.subr.mxu0 0.0
    %447 = vmatpush1.msra.mxu0 %v28
    %448 = vmatprep.subr.mxu0 0.0
    %449 = vmatpush1.msra.mxu0 %v27
    %450 = vmatprep.subr.mxu0 0.0
    %451 = vmatpush1.msra.mxu0 %v26
    %452 = vmatprep.subr.mxu0 0.0
    %453 = vmatpush2.msra.mxu0 %v57
    %454 = vmatprep.subr.mxu0 0.0
    %455 = vmatpush2.msra.mxu0 %v56
    %456 = vmatprep.subr.mxu0 0.0
    %457 = vmatpush2.msra.mxu0 %v55
    %458 = vmatprep.subr.mxu0 0.0
    %459 = vmatpush2.msra.mxu0 %v54
    %460 = vmatprep.subr.mxu0 0.0
    %461 = vmatpush2.msra.mxu0 %v53
    %462 = vmatprep.subr.mxu0 0.0
    %463 = vmatpush2.msra.mxu0 %v52
    %464 = vmatprep.subr.mxu0 0.0
    %465 = vmatpush2.msra.mxu0 %v51
    %466 = vmatprep.subr.mxu0 0.0
    %467 = vmatpush2.msra.mxu0 %v50
    %468 = vmatprep.subr.mxu0 0.0
    %469 = vmatpush2.msra.mxu0 %v49
    %470 = vmatprep.subr.mxu0 0.0
    %471 = vmatpush2.msra.mxu0 %v48
    %472 = vmatprep.subr.mxu0 0.0
    %473 = vmatpush2.msra.mxu0 %v47
    %474 = vmatprep.subr.mxu0 0.0
    %475 = vmatpush2.msra.mxu0 %v46
    %476 = vmatprep.subr.mxu0 0.0
    %477 = vmatpush2.msra.mxu0 %v45
    %478 = vmatprep.subr.mxu0 0.0
    %479 = vmatpush2.msra.mxu0 %v44
    %480 = vmatprep.subr.mxu0 0.0
    %481 = vmatpush2.msra.mxu0 %v43
    %482 = vmatprep.subr.mxu0 0.0
    %483 = vmatpush2.msra.mxu0 %v42
    %484 = vmatprep.mubr.f32.mxu0 %v341
    %485 = vmatmul.mubr.f32.gmra.mxu0 %v333
    %v486 = vpop.f32.mrf.mxu0
    %v487 = vadd.f32 %v319, %v486
    %v488 = vpop.f32.mrf.mxu0
    %489 = vdwg.mxu0
    %490 = vmatprep.subr.mxu0 0.0
    %491 = vmatpush1.msra.mxu0 %v73
    %492 = vmatprep.subr.mxu0 0.0
    %493 = vmatpush1.msra.mxu0 %v72
    %494 = vmatprep.subr.mxu0 0.0
    %495 = vmatpush1.msra.mxu0 %v71
    %496 = vmatprep.subr.mxu0 0.0
    %497 = vmatpush1.msra.mxu0 %v70
    %498 = vmatprep.subr.mxu0 0.0
    %499 = vmatpush1.msra.mxu0 %v69
    %500 = vmatprep.subr.mxu0 0.0
    %501 = vmatpush1.msra.mxu0 %v68
    %502 = vmatprep.subr.mxu0 0.0
    %503 = vmatpush1.msra.mxu0 %v67
    %504 = vmatprep.subr.mxu0 0.0
    %505 = vmatpush1.msra.mxu0 %v66
    %506 = vmatprep.subr.mxu0 0.0
    %507 = vmatpush1.msra.mxu0 %v65
    %508 = vmatprep.subr.mxu0 0.0
    %509 = vmatpush1.msra.mxu0 %v64
    %510 = vmatprep.subr.mxu0 0.0
    %511 = vmatpush1.msra.mxu0 %v63
    %512 = vmatprep.subr.mxu0 0.0
    %513 = vmatpush1.msra.mxu0 %v62
    %514 = vmatprep.subr.mxu0 0.0
    %515 = vmatpush1.msra.mxu0 %v61
    %516 = vmatprep.subr.mxu0 0.0
    %517 = vmatpush1.msra.mxu0 %v60
    %518 = vmatprep.subr.mxu0 0.0
    %519 = vmatpush1.msra.mxu0 %v59
    %520 = vmatprep.subr.mxu0 0.0
    %521 = vmatpush1.msra.mxu0 %v58
    %522 = vmatprep.subr.mxu0 0.0
    %523 = vmatpush2.msra.mxu0 %v89
    %524 = vmatprep.subr.mxu0 0.0
    %525 = vmatpush2.msra.mxu0 %v88
    %526 = vmatprep.subr.mxu0 0.0
    %527 = vmatpush2.msra.mxu0 %v87
    %528 = vmatprep.subr.mxu0 0.0
    %529 = vmatpush2.msra.mxu0 %v86
    %530 = vmatprep.subr.mxu0 0.0
    %531 = vmatpush2.msra.mxu0 %v85
    %532 = vmatprep.subr.mxu0 0.0
    %533 = vmatpush2.msra.mxu0 %v84
    %534 = vmatprep.subr.mxu0 0.0
    %535 = vmatpush2.msra.mxu0 %v83
    %536 = vmatprep.subr.mxu0 0.0
    %537 = vmatpush2.msra.mxu0 %v82
    %538 = vmatprep.subr.mxu0 0.0
    %539 = vmatpush2.msra.mxu0 %v81
    %540 = vmatprep.subr.mxu0 0.0
    %541 = vmatpush2.msra.mxu0 %v80
    %542 = vmatprep.subr.mxu0 0.0
    %543 = vmatpush2.msra.mxu0 %v79
    %544 = vmatprep.subr.mxu0 0.0
    %545 = vmatpush2.msra.mxu0 %v78
    %546 = vmatprep.subr.mxu0 0.0
    %547 = vmatpush2.msra.mxu0 %v77
    %548 = vmatprep.subr.mxu0 0.0
    %549 = vmatpush2.msra.mxu0 %v76
    %550 = vmatprep.subr.mxu0 0.0
    %551 = vmatpush2.msra.mxu0 %v75
    %552 = vmatprep.subr.mxu0 0.0
    %553 = vmatpush2.msra.mxu0 %v74
    %554 = vmatprep.mubr.f32.mxu0 %v342
    %555 = vmatmul.mubr.f32.gmra.mxu0 %v340
    %v556 = vpop.f32.mrf.mxu0
    %v557 = vadd.f32 %v487, %v556
    %v558 = vpop.f32.mrf.mxu0
    %559 = vdwg.mxu0
    %560 = vmatprep.subr.mxu0 0.0
    %561 = vmatpush1.msra.mxu0 %v105
    %562 = vmatprep.subr.mxu0 0.0
    %563 = vmatpush1.msra.mxu0 %v104
    %564 = vmatprep.subr.mxu0 0.0
    %565 = vmatpush1.msra.mxu0 %v103
    %566 = vmatprep.subr.mxu0 0.0
    %567 = vmatpush1.msra.mxu0 %v102
    %568 = vmatprep.subr.mxu0 0.0
    %569 = vmatpush1.msra.mxu0 %v101
    %570 = vmatprep.subr.mxu0 0.0
    %571 = vmatpush1.msra.mxu0 %v100
    %572 = vmatprep.subr.mxu0 0.0
    %573 = vmatpush1.msra.mxu0 %v99
    %574 = vmatprep.subr.mxu0 0.0
    %575 = vmatpush1.msra.mxu0 %v98
    %576 = vmatprep.subr.mxu0 0.0
    %577 = vmatpush1.msra.mxu0 %v97
    %578 = vmatprep.subr.mxu0 0.0
    %579 = vmatpush1.msra.mxu0 %v96
    %580 = vmatprep.subr.mxu0 0.0
    %581 = vmatpush1.msra.mxu0 %v95
    %582 = vmatprep.subr.mxu0 0.0
    %583 = vmatpush1.msra.mxu0 %v94
    %584 = vmatprep.subr.mxu0 0.0
    %585 = vmatpush1.msra.mxu0 %v93
    %586 = vmatprep.subr.mxu0 0.0
    %587 = vmatpush1.msra.mxu0 %v92
    %588 = vmatprep.subr.mxu0 0.0
    %589 = vmatpush1.msra.mxu0 %v91
    %590 = vmatprep.subr.mxu0 0.0
    %591 = vmatpush1.msra.mxu0 %v90
    %592 = vmatprep.subr.mxu0 0.0
    %593 = vmatpush2.msra.mxu0 %v121
    %594 = vmatprep.subr.mxu0 0.0
    %595 = vmatpush2.msra.mxu0 %v120
    %596 = vmatprep.subr.mxu0 0.0
    %597 = vmatpush2.msra.mxu0 %v119
    %598 = vmatprep.subr.mxu0 0.0
    %599 = vmatpush2.msra.mxu0 %v118
    %600 = vmatprep.subr.mxu0 0.0
    %601 = vmatpush2.msra.mxu0 %v117
    %602 = vmatprep.subr.mxu0 0.0
    %603 = vmatpush2.msra.mxu0 %v116
    %604 = vmatprep.subr.mxu0 0.0
    %605 = vmatpush2.msra.mxu0 %v115
    %606 = vmatprep.subr.mxu0 0.0
    %607 = vmatpush2.msra.mxu0 %v114
    %608 = vmatprep.subr.mxu0 0.0
    %609 = vmatpush2.msra.mxu0 %v113
    %610 = vmatprep.subr.mxu0 0.0
    %611 = vmatpush2.msra.mxu0 %v112
    %612 = vmatprep.subr.mxu0 0.0
    %613 = vmatpush2.msra.mxu0 %v111
    %614 = vmatprep.subr.mxu0 0.0
    %615 = vmatpush2.msra.mxu0 %v110
    %616 = vmatprep.subr.mxu0 0.0
    %617 = vmatpush2.msra.mxu0 %v109
    %618 = vmatprep.subr.mxu0 0.0
    %619 = vmatpush2.msra.mxu0 %v108
    %620 = vmatprep.subr.mxu0 0.0
    %621 = vmatpush2.msra.mxu0 %v107
    %622 = vmatprep.subr.mxu0 0.0
    %623 = vmatpush2.msra.mxu0 %v106
    %624 = vmatprep.mubr.f32.mxu0 %v358
    %625 = vmatmul.mubr.f32.gmra.mxu0 %v350
    %v626 = vpop.f32.mrf.mxu0
    %v627 = vadd.f32 %v557, %v626
    %v628 = vpop.f32.mrf.mxu0
    %629 = vdwg.mxu0
    %630 = vmatprep.subr.mxu0 0.0
    %631 = vmatpush1.msra.mxu0 %v137
    %632 = vmatprep.subr.mxu0 0.0
    %633 = vmatpush1.msra.mxu0 %v136
    %634 = vmatprep.subr.mxu0 0.0
    %635 = vmatpush1.msra.mxu0 %v135
    %636 = vmatprep.subr.mxu0 0.0
    %637 = vmatpush1.msra.mxu0 %v134
    %638 = vmatprep.subr.mxu0 0.0
    %639 = vmatpush1.msra.mxu0 %v133
    %640 = vmatprep.subr.mxu0 0.0
    %641 = vmatpush1.msra.mxu0 %v132
    %642 = vmatprep.subr.mxu0 0.0
    %643 = vmatpush1.msra.mxu0 %v131
    %644 = vmatprep.subr.mxu0 0.0
    %645 = vmatpush1.msra.mxu0 %v130
    %646 = vmatprep.subr.mxu0 0.0
    %647 = vmatpush1.msra.mxu0 %v129
    %648 = vmatprep.subr.mxu0 0.0
    %649 = vmatpush1.msra.mxu0 %v128
    %650 = vmatprep.subr.mxu0 0.0
    %651 = vmatpush1.msra.mxu0 %v127
    %652 = vmatprep.subr.mxu0 0.0
    %653 = vmatpush1.msra.mxu0 %v126
    %654 = vmatprep.subr.mxu0 0.0
    %655 = vmatpush1.msra.mxu0 %v125
    %656 = vmatprep.subr.mxu0 0.0
    %657 = vmatpush1.msra.mxu0 %v124
    %658 = vmatprep.subr.mxu0 0.0
    %659 = vmatpush1.msra.mxu0 %v123
    %660 = vmatprep.subr.mxu0 0.0
    %661 = vmatpush1.msra.mxu0 %v122
    %662 = vmatprep.subr.mxu0 0.0
    %663 = vmatpush2.msra.mxu0 %v153
    %664 = vmatprep.subr.mxu0 0.0
    %665 = vmatpush2.msra.mxu0 %v152
    %666 = vmatprep.subr.mxu0 0.0
    %667 = vmatpush2.msra.mxu0 %v151
    %668 = vmatprep.subr.mxu0 0.0
    %669 = vmatpush2.msra.mxu0 %v150
    %670 = vmatprep.subr.mxu0 0.0
    %671 = vmatpush2.msra.mxu0 %v149
    %672 = vmatprep.subr.mxu0 0.0
    %673 = vmatpush2.msra.mxu0 %v148
    %674 = vmatprep.subr.mxu0 0.0
    %675 = vmatpush2.msra.mxu0 %v147
    %676 = vmatprep.subr.mxu0 0.0
    %677 = vmatpush2.msra.mxu0 %v146
    %678 = vmatprep.subr.mxu0 0.0
    %679 = vmatpush2.msra.mxu0 %v145
    %680 = vmatprep.subr.mxu0 0.0
    %681 = vmatpush2.msra.mxu0 %v144
    %682 = vmatprep.subr.mxu0 0.0
    %683 = vmatpush2.msra.mxu0 %v143
    %684 = vmatprep.subr.mxu0 0.0
    %685 = vmatpush2.msra.mxu0 %v142
    %686 = vmatprep.subr.mxu0 0.0
    %687 = vmatpush2.msra.mxu0 %v141
    %688 = vmatprep.subr.mxu0 0.0
    %689 = vmatpush2.msra.mxu0 %v140
    %690 = vmatprep.subr.mxu0 0.0
    %691 = vmatpush2.msra.mxu0 %v139
    %692 = vmatprep.subr.mxu0 0.0
    %693 = vmatpush2.msra.mxu0 %v138
    %694 = vmatprep.mubr.f32.mxu0 %v359
    %695 = vmatmul.mubr.f32.gmra.mxu0 %v357
    %v696 = vpop.f32.mrf.mxu0
    %v697 = vadd.f32 %v627, %v696
    %v698 = vpop.f32.mrf.mxu0
    %699 = vdwg.mxu0
    %700 = vmatprep.subr.mxu0 0.0
    %701 = vmatpush1.msra.mxu0 %v169
    %702 = vmatprep.subr.mxu0 0.0
    %703 = vmatpush1.msra.mxu0 %v168
    %704 = vmatprep.subr.mxu0 0.0
    %705 = vmatpush1.msra.mxu0 %v167
    %706 = vmatprep.subr.mxu0 0.0
    %707 = vmatpush1.msra.mxu0 %v166
    %708 = vmatprep.subr.mxu0 0.0
    %709 = vmatpush1.msra.mxu0 %v165
    %710 = vmatprep.subr.mxu0 0.0
    %711 = vmatpush1.msra.mxu0 %v164
    %712 = vmatprep.subr.mxu0 0.0
    %713 = vmatpush1.msra.mxu0 %v163
    %714 = vmatprep.subr.mxu0 0.0
    %715 = vmatpush1.msra.mxu0 %v162
    %716 = vmatprep.subr.mxu0 0.0
    %717 = vmatpush1.msra.mxu0 %v161
    %718 = vmatprep.subr.mxu0 0.0
    %719 = vmatpush1.msra.mxu0 %v160
    %720 = vmatprep.subr.mxu0 0.0
    %721 = vmatpush1.msra.mxu0 %v159
    %722 = vmatprep.subr.mxu0 0.0
    %723 = vmatpush1.msra.mxu0 %v158
    %724 = vmatprep.subr.mxu0 0.0
    %725 = vmatpush1.msra.mxu0 %v157
    %726 = vmatprep.subr.mxu0 0.0
    %727 = vmatpush1.msra.mxu0 %v156
    %728 = vmatprep.subr.mxu0 0.0
    %729 = vmatpush1.msra.mxu0 %v155
    %730 = vmatprep.subr.mxu0 0.0
    %731 = vmatpush1.msra.mxu0 %v154
    %732 = vmatprep.subr.mxu0 0.0
    %733 = vmatpush2.msra.mxu0 %v185
    %734 = vmatprep.subr.mxu0 0.0
    %735 = vmatpush2.msra.mxu0 %v184
    %736 = vmatprep.subr.mxu0 0.0
    %737 = vmatpush2.msra.mxu0 %v183
    %738 = vmatprep.subr.mxu0 0.0
    %739 = vmatpush2.msra.mxu0 %v182
    %740 = vmatprep.subr.mxu0 0.0
    %741 = vmatpush2.msra.mxu0 %v181
    %742 = vmatprep.subr.mxu0 0.0
    %743 = vmatpush2.msra.mxu0 %v180
    %744 = vmatprep.subr.mxu0 0.0
    %745 = vmatpush2.msra.mxu0 %v179
    %746 = vmatprep.subr.mxu0 0.0
    %747 = vmatpush2.msra.mxu0 %v178
    %748 = vmatprep.subr.mxu0 0.0
    %749 = vmatpush2.msra.mxu0 %v177
    %750 = vmatprep.subr.mxu0 0.0
    %751 = vmatpush2.msra.mxu0 %v176
    %752 = vmatprep.subr.mxu0 0.0
    %753 = vmatpush2.msra.mxu0 %v175
    %754 = vmatprep.subr.mxu0 0.0
    %755 = vmatpush2.msra.mxu0 %v174
    %756 = vmatprep.subr.mxu0 0.0
    %757 = vmatpush2.msra.mxu0 %v173
    %758 = vmatprep.subr.mxu0 0.0
    %759 = vmatpush2.msra.mxu0 %v172
    %760 = vmatprep.subr.mxu0 0.0
    %761 = vmatpush2.msra.mxu0 %v171
    %762 = vmatprep.subr.mxu0 0.0
    %763 = vmatpush2.msra.mxu0 %v170
    %764 = vmatprep.mubr.f32.mxu0 %v375
    %765 = vmatmul.mubr.f32.gmra.mxu0 %v367
    %v766 = vpop.f32.mrf.mxu0
    %v767 = vadd.f32 %v697, %v766
    %v768 = vpop.f32.mrf.mxu0
    %769 = vdwg.mxu0
    %770 = vmatprep.subr.mxu0 0.0
    %771 = vmatpush1.msra.mxu0 %v201
    %772 = vmatprep.subr.mxu0 0.0
    %773 = vmatpush1.msra.mxu0 %v200
    %774 = vmatprep.subr.mxu0 0.0
    %775 = vmatpush1.msra.mxu0 %v199
    %776 = vmatprep.subr.mxu0 0.0
    %777 = vmatpush1.msra.mxu0 %v198
    %778 = vmatprep.subr.mxu0 0.0
    %779 = vmatpush1.msra.mxu0 %v197
    %780 = vmatprep.subr.mxu0 0.0
    %781 = vmatpush1.msra.mxu0 %v196
    %782 = vmatprep.subr.mxu0 0.0
    %783 = vmatpush1.msra.mxu0 %v195
    %784 = vmatprep.subr.mxu0 0.0
    %785 = vmatpush1.msra.mxu0 %v194
    %786 = vmatprep.subr.mxu0 0.0
    %787 = vmatpush1.msra.mxu0 %v193
    %788 = vmatprep.subr.mxu0 0.0
    %789 = vmatpush1.msra.mxu0 %v192
    %790 = vmatprep.subr.mxu0 0.0
    %791 = vmatpush1.msra.mxu0 %v191
    %792 = vmatprep.subr.mxu0 0.0
    %793 = vmatpush1.msra.mxu0 %v190
    %794 = vmatprep.subr.mxu0 0.0
    %795 = vmatpush1.msra.mxu0 %v189
    %796 = vmatprep.subr.mxu0 0.0
    %797 = vmatpush1.msra.mxu0 %v188
    %798 = vmatprep.subr.mxu0 0.0
    %799 = vmatpush1.msra.mxu0 %v187
    %800 = vmatprep.subr.mxu0 0.0
    %801 = vmatpush1.msra.mxu0 %v186
    %802 = vmatprep.subr.mxu0 0.0
    %803 = vmatpush2.msra.mxu0 %v217
    %804 = vmatprep.subr.mxu0 0.0
    %805 = vmatpush2.msra.mxu0 %v216
    %806 = vmatprep.subr.mxu0 0.0
    %807 = vmatpush2.msra.mxu0 %v215
    %808 = vmatprep.subr.mxu0 0.0
    %809 = vmatpush2.msra.mxu0 %v214
    %810 = vmatprep.subr.mxu0 0.0
    %811 = vmatpush2.msra.mxu0 %v213
    %812 = vmatprep.subr.mxu0 0.0
    %813 = vmatpush2.msra.mxu0 %v212
    %814 = vmatprep.subr.mxu0 0.0
    %815 = vmatpush2.msra.mxu0 %v211
    %816 = vmatprep.subr.mxu0 0.0
    %817 = vmatpush2.msra.mxu0 %v210
    %818 = vmatprep.subr.mxu0 0.0
    %819 = vmatpush2.msra.mxu0 %v209
    %820 = vmatprep.subr.mxu0 0.0
    %821 = vmatpush2.msra.mxu0 %v208
    %822 = vmatprep.subr.mxu0 0.0
    %823 = vmatpush2.msra.mxu0 %v207
    %824 = vmatprep.subr.mxu0 0.0
    %825 = vmatpush2.msra.mxu0 %v206
    %826 = vmatprep.subr.mxu0 0.0
    %827 = vmatpush2.msra.mxu0 %v205
    %828 = vmatprep.subr.mxu0 0.0
    %829 = vmatpush2.msra.mxu0 %v204
    %830 = vmatprep.subr.mxu0 0.0
    %831 = vmatpush2.msra.mxu0 %v203
    %832 = vmatprep.subr.mxu0 0.0
    %833 = vmatpush2.msra.mxu0 %v202
    %834 = vmatprep.mubr.f32.mxu0 %v376
    %835 = vmatmul.mubr.f32.gmra.mxu0 %v374
    %v836 = vpop.f32.mrf.mxu0
    %v837 = vadd.f32 %v767, %v836
    %v838 = vpop.f32.mrf.mxu0
    %839 = vdwg.mxu0
    %840 = vmatprep.subr.mxu0 0.0
    %841 = vmatpush1.msra.mxu0 %v233
    %842 = vmatprep.subr.mxu0 0.0
    %843 = vmatpush1.msra.mxu0 %v232
    %844 = vmatprep.subr.mxu0 0.0
    %845 = vmatpush1.msra.mxu0 %v231
    %846 = vmatprep.subr.mxu0 0.0
    %847 = vmatpush1.msra.mxu0 %v230
    %848 = vmatprep.subr.mxu0 0.0
    %849 = vmatpush1.msra.mxu0 %v229
    %850 = vmatprep.subr.mxu0 0.0
    %851 = vmatpush1.msra.mxu0 %v228
    %852 = vmatprep.subr.mxu0 0.0
    %853 = vmatpush1.msra.mxu0 %v227
    %854 = vmatprep.subr.mxu0 0.0
    %855 = vmatpush1.msra.mxu0 %v226
    %856 = vmatprep.subr.mxu0 0.0
    %857 = vmatpush1.msra.mxu0 %v225
    %858 = vmatprep.subr.mxu0 0.0
    %859 = vmatpush1.msra.mxu0 %v224
    %860 = vmatprep.subr.mxu0 0.0
    %861 = vmatpush1.msra.mxu0 %v223
    %862 = vmatprep.subr.mxu0 0.0
    %863 = vmatpush1.msra.mxu0 %v222
    %864 = vmatprep.subr.mxu0 0.0
    %865 = vmatpush1.msra.mxu0 %v221
    %866 = vmatprep.subr.mxu0 0.0
    %867 = vmatpush1.msra.mxu0 %v220
    %868 = vmatprep.subr.mxu0 0.0
    %869 = vmatpush1.msra.mxu0 %v219
    %870 = vmatprep.subr.mxu0 0.0
    %871 = vmatpush1.msra.mxu0 %v218
    %872 = vmatprep.subr.mxu0 0.0
    %873 = vmatpush2.msra.mxu0 %v249
    %874 = vmatprep.subr.mxu0 0.0
    %875 = vmatpush2.msra.mxu0 %v248
    %876 = vmatprep.subr.mxu0 0.0
    %877 = vmatpush2.msra.mxu0 %v247
    %878 = vmatprep.subr.mxu0 0.0
    %879 = vmatpush2.msra.mxu0 %v246
    %880 = vmatprep.subr.mxu0 0.0
    %881 = vmatpush2.msra.mxu0 %v245
    %882 = vmatprep.subr.mxu0 0.0
    %883 = vmatpush2.msra.mxu0 %v244
    %884 = vmatprep.subr.mxu0 0.0
    %885 = vmatpush2.msra.mxu0 %v243
    %886 = vmatprep.subr.mxu0 0.0
    %887 = vmatpush2.msra.mxu0 %v242
    %888 = vmatprep.subr.mxu0 0.0
    %889 = vmatpush2.msra.mxu0 %v241
    %890 = vmatprep.subr.mxu0 0.0
    %891 = vmatpush2.msra.mxu0 %v240
    %892 = vmatprep.subr.mxu0 0.0
    %893 = vmatpush2.msra.mxu0 %v239
    %894 = vmatprep.subr.mxu0 0.0
    %895 = vmatpush2.msra.mxu0 %v238
    %896 = vmatprep.subr.mxu0 0.0
    %897 = vmatpush2.msra.mxu0 %v237
    %898 = vmatprep.subr.mxu0 0.0
    %899 = vmatpush2.msra.mxu0 %v236
    %900 = vmatprep.subr.mxu0 0.0
    %901 = vmatpush2.msra.mxu0 %v235
    %902 = vmatprep.subr.mxu0 0.0
    %903 = vmatpush2.msra.mxu0 %v234
    %904 = vmatprep.mubr.f32.mxu0 %v392
    %905 = vmatmul.mubr.f32.gmra.mxu0 %v384
    %v906 = vpop.f32.mrf.mxu0
    %v907 = vadd.f32 %v837, %v906
    %v908 = vpop.f32.mrf.mxu0
    %909 = vdwg.mxu0
    %910 = vmatprep.subr.mxu0 0.0
    %911 = vmatpush1.msra.mxu0 %v265
    %912 = vmatprep.subr.mxu0 0.0
    %913 = vmatpush1.msra.mxu0 %v264
    %914 = vmatprep.subr.mxu0 0.0
    %915 = vmatpush1.msra.mxu0 %v263
    %916 = vmatprep.subr.mxu0 0.0
    %917 = vmatpush1.msra.mxu0 %v262
    %918 = vmatprep.subr.mxu0 0.0
    %919 = vmatpush1.msra.mxu0 %v261
    %920 = vmatprep.subr.mxu0 0.0
    %921 = vmatpush1.msra.mxu0 %v260
    %922 = vmatprep.subr.mxu0 0.0
    %923 = vmatpush1.msra.mxu0 %v259
    %924 = vmatprep.subr.mxu0 0.0
    %925 = vmatpush1.msra.mxu0 %v258
    %926 = vmatprep.subr.mxu0 0.0
    %927 = vmatpush1.msra.mxu0 %v257
    %928 = vmatprep.subr.mxu0 0.0
    %929 = vmatpush1.msra.mxu0 %v256
    %930 = vmatprep.subr.mxu0 0.0
    %931 = vmatpush1.msra.mxu0 %v255
    %932 = vmatprep.subr.mxu0 0.0
    %933 = vmatpush1.msra.mxu0 %v254
    %934 = vmatprep.subr.mxu0 0.0
    %935 = vmatpush1.msra.mxu0 %v253
    %936 = vmatprep.subr.mxu0 0.0
    %937 = vmatpush1.msra.mxu0 %v252
    %938 = vmatprep.subr.mxu0 0.0
    %939 = vmatpush1.msra.mxu0 %v251
    %940 = vmatprep.subr.mxu0 0.0
    %941 = vmatpush1.msra.mxu0 %v250
    %942 = vmatprep.subr.mxu0 0.0
    %943 = vmatpush2.msra.mxu0 %v281
    %944 = vmatprep.subr.mxu0 0.0
    %945 = vmatpush2.msra.mxu0 %v280
    %946 = vmatprep.subr.mxu0 0.0
    %947 = vmatpush2.msra.mxu0 %v279
    %948 = vmatprep.subr.mxu0 0.0
    %949 = vmatpush2.msra.mxu0 %v278
    %950 = vmatprep.subr.mxu0 0.0
    %951 = vmatpush2.msra.mxu0 %v277
    %952 = vmatprep.subr.mxu0 0.0
    %953 = vmatpush2.msra.mxu0 %v276
    %954 = vmatprep.subr.mxu0 0.0
    %955 = vmatpush2.msra.mxu0 %v275
    %956 = vmatprep.subr.mxu0 0.0
    %957 = vmatpush2.msra.mxu0 %v274
    %958 = vmatprep.subr.mxu0 0.0
    %959 = vmatpush2.msra.mxu0 %v273
    %960 = vmatprep.subr.mxu0 0.0
    %961 = vmatpush2.msra.mxu0 %v272
    %962 = vmatprep.subr.mxu0 0.0
    %963 = vmatpush2.msra.mxu0 %v271
    %964 = vmatprep.subr.mxu0 0.0
    %965 = vmatpush2.msra.mxu0 %v270
    %966 = vmatprep.subr.mxu0 0.0
    %967 = vmatpush2.msra.mxu0 %v269
    %968 = vmatprep.subr.mxu0 0.0
    %969 = vmatpush2.msra.mxu0 %v268
    %970 = vmatprep.subr.mxu0 0.0
    %971 = vmatpush2.msra.mxu0 %v267
    %972 = vmatprep.subr.mxu0 0.0
    %973 = vmatpush2.msra.mxu0 %v266
    %974 = vmatprep.mubr.f32.mxu0 %v393
    %975 = vmatmul.mubr.f32.gmra.mxu0 %v391
    %v976 = vpop.f32.mrf.mxu0
    %v977 = vadd.f32 %v907, %v976
    %v978 = vpop.f32.mrf.mxu0
    %979 = vdwg.mxu0
    %980 = vmatprep.subr.mxu0 0.0
    %981 = vmatpush1.msra.mxu0 %v297
    %982 = vmatprep.subr.mxu0 0.0
    %983 = vmatpush1.msra.mxu0 %v296
    %984 = vmatprep.subr.mxu0 0.0
    %985 = vmatpush1.msra.mxu0 %v295
    %986 = vmatprep.subr.mxu0 0.0
    %987 = vmatpush1.msra.mxu0 %v294
    %988 = vmatprep.subr.mxu0 0.0
    %989 = vmatpush1.msra.mxu0 %v293
    %990 = vmatprep.subr.mxu0 0.0
    %991 = vmatpush1.msra.mxu0 %v292
    %992 = vmatprep.subr.mxu0 0.0
    %993 = vmatpush1.msra.mxu0 %v291
    %994 = vmatprep.subr.mxu0 0.0
    %995 = vmatpush1.msra.mxu0 %v290
    %996 = vmatprep.subr.mxu0 0.0
    %997 = vmatpush1.msra.mxu0 %v289
    %998 = vmatprep.subr.mxu0 0.0
    %999 = vmatpush1.msra.mxu0 %v288
    %1000 = vmatprep.subr.mxu0 0.0
    %1001 = vmatpush1.msra.mxu0 %v287
    %1002 = vmatprep.subr.mxu0 0.0
    %1003 = vmatpush1.msra.mxu0 %v286
    %1004 = vmatprep.subr.mxu0 0.0
    %1005 = vmatpush1.msra.mxu0 %v285
    %1006 = vmatprep.subr.mxu0 0.0
    %1007 = vmatpush1.msra.mxu0 %v284
    %1008 = vmatprep.subr.mxu0 0.0
    %1009 = vmatpush1.msra.mxu0 %v283
    %1010 = vmatprep.subr.mxu0 0.0
    %1011 = vmatpush1.msra.mxu0 %v282
    %1012 = vmatprep.subr.mxu0 0.0
    %1013 = vmatpush2.msra.mxu0 %v313
    %1014 = vmatprep.subr.mxu0 0.0
    %1015 = vmatpush2.msra.mxu0 %v312
    %1016 = vmatprep.subr.mxu0 0.0
    %1017 = vmatpush2.msra.mxu0 %v311
    %1018 = vmatprep.subr.mxu0 0.0
    %1019 = vmatpush2.msra.mxu0 %v310
    %1020 = vmatprep.subr.mxu0 0.0
    %1021 = vmatpush2.msra.mxu0 %v309
    %1022 = vmatprep.subr.mxu0 0.0
    %1023 = vmatpush2.msra.mxu0 %v308
    %1024 = vmatprep.subr.mxu0 0.0
    %1025 = vmatpush2.msra.mxu0 %v307
    %1026 = vmatprep.subr.mxu0 0.0
    %1027 = vmatpush2.msra.mxu0 %v306
    %1028 = vmatprep.subr.mxu0 0.0
    %1029 = vmatpush2.msra.mxu0 %v305
    %1030 = vmatprep.subr.mxu0 0.0
    %1031 = vmatpush2.msra.mxu0 %v304
    %1032 = vmatprep.subr.mxu0 0.0
    %1033 = vmatpush2.msra.mxu0 %v303
    %1034 = vmatprep.subr.mxu0 0.0
    %1035 = vmatpush2.msra.mxu0 %v302
    %1036 = vmatprep.subr.mxu0 0.0
    %1037 = vmatpush2.msra.mxu0 %v301
    %1038 = vmatprep.subr.mxu0 0.0
    %1039 = vmatpush2.msra.mxu0 %v300
    %1040 = vmatprep.subr.mxu0 0.0
    %1041 = vmatpush2.msra.mxu0 %v299
    %1042 = vmatprep.subr.mxu0 0.0
    %1043 = vmatpush2.msra.mxu0 %v298
    %1044 = vmatprep.mubr.f32.mxu0 %v401
    %1045 = vmatmul.mubr.f32.gmra.mxu0 %v400
    %v1046 = vpop.f32.mrf.mxu0
    %v1047 = vadd.f32 %v977, %v1046
    %v1048 = vpop.f32.mrf.mxu0
    %1049 = vdwg.mxu0
    %v1050 = vmax.f32 %v1047, 0.0
    %v1051 = vld [vmem:[%s3] sm:$0xff]
    %v1052 = vld [vmem:[%s3 + $0x8] sm:$0xff]
    %v1053 = vld [vmem:[%s3 + $0x10] sm:$0xff]
    %v1054 = vld [vmem:[%s3 + $0x18] sm:$0xff]
    %v1055 = vld [vmem:[%s3 + $0x20] sm:$0xff]
    %v1056 = vld [vmem:[%s3 + $0x28] sm:$0xff]
    %v1057 = vld [vmem:[%s3 + $0x30] sm:$0xff]
    %v1058 = vld [vmem:[%s3 + $0x38] sm:$0xff]
    %v1059 = vld [vmem:[%s3 + $0x40] sm:$0xff]
    %v1060 = vld [vmem:[%s3 + $0x48] sm:$0xff]
    %v1061 = vld [vmem:[%s3 + $0x50] sm:$0xff]
    %v1062 = vld [vmem:[%s3 + $0x58] sm:$0xff]
    %v1063 = vld [vmem:[%s3 + $0x60] sm:$0xff]
    %v1064 = vld [vmem:[%s3 + $0x68] sm:$0xff]
    %v1065 = vld [vmem:[%s3 + $0x70] sm:$0xff]
    %v1066 = vld [vmem:[%s4] sm:$0x1]
    %v1068 = vlaneseq
    %v1069 = vshrl.u32 %v1068, 7
    %v1070 = vsub.s32 0, %v1069
    %v1071 = vrot.slane %v1066, %v1070
    %vm1073 = vcmask 982016
    %v1075 = vsel %vm1073, %v1050, 0
    %1077 = vmatprep.subr.mxu0 0.0
    %1078 = vmatpush1.msra.mxu0 0.0
    %1079 = vmatprep.subr.mxu0 0.0
    %1080 = vmatpush1.msra.mxu0 %v1065
    %1081 = vmatprep.subr.mxu0 0.0
    %1082 = vmatpush1.msra.mxu0 %v1064
    %1083 = vmatprep.subr.mxu0 0.0
    %1084 = vmatpush1.msra.mxu0 %v1063
    %1085 = vmatprep.subr.mxu0 0.0
    %1086 = vmatpush1.msra.mxu0 %v1062
    %1087 = vmatprep.subr.mxu0 0.0
    %1088 = vmatpush1.msra.mxu0 %v1061
    %1089 = vmatprep.subr.mxu0 0.0
    %1090 = vmatpush1.msra.mxu0 %v1060
    %1091 = vmatprep.subr.mxu0 0.0
    %1092 = vmatpush1.msra.mxu0 %v1059
    %1093 = vmatprep.subr.mxu0 0.0
    %1094 = vmatpush1.msra.mxu0 %v1058
    %1095 = vmatprep.subr.mxu0 0.0
    %1096 = vmatpush1.msra.mxu0 %v1057
    %1097 = vmatprep.subr.mxu0 0.0
    %1098 = vmatpush1.msra.mxu0 %v1056
    %1099 = vmatprep.subr.mxu0 0.0
    %1100 = vmatpush1.msra.mxu0 %v1055
    %1101 = vmatprep.subr.mxu0 0.0
    %1102 = vmatpush1.msra.mxu0 %v1054
    %1103 = vmatprep.subr.mxu0 0.0
    %1104 = vmatpush1.msra.mxu0 %v1053
    %1105 = vmatprep.subr.mxu0 0.0
    %1106 = vmatpush1.msra.mxu0 %v1052
    %1107 = vmatprep.subr.mxu0 0.0
    %1108 = vmatpush1.msra.mxu0 %v1051
    %1109 = vmatprep.subr.mxu0 0.0
    %1110 = vmatpush2.msra.mxu0 0.0
    %1111 = vmatprep.subr.mxu0 0.0
    %1112 = vmatpush2.msra.mxu0 0.0
    %1113 = vmatprep.subr.mxu0 0.0
    %1114 = vmatpush2.msra.mxu0 0.0
    %1115 = vmatprep.subr.mxu0 0.0
    %1116 = vmatpush2.msra.mxu0 0.0
    %1117 = vmatprep.subr.mxu0 0.0
    %1118 = vmatpush2.msra.mxu0 0.0
    %1119 = vmatprep.subr.mxu0 0.0
    %1120 = vmatpush2.msra.mxu0 0.0
    %1121 = vmatprep.subr.mxu0 0.0
    %1122 = vmatpush2.msra.mxu0 0.0
    %1123 = vmatprep.subr.mxu0 0.0
    %1124 = vmatpush2.msra.mxu0 0.0
    %1125 = vmatprep.subr.mxu0 0.0
    %1126 = vmatpush2.msra.mxu0 0.0
    %1127 = vmatprep.subr.mxu0 0.0
    %1128 = vmatpush2.msra.mxu0 0.0
    %1129 = vmatprep.subr.mxu0 0.0
    %1130 = vmatpush2.msra.mxu0 0.0
    %1131 = vmatprep.subr.mxu0 0.0
    %1132 = vmatpush2.msra.mxu0 0.0
    %1133 = vmatprep.subr.mxu0 0.0
    %1134 = vmatpush2.msra.mxu0 0.0
    %1135 = vmatprep.subr.mxu0 0.0
    %1136 = vmatpush2.msra.mxu0 0.0
    %1137 = vmatprep.subr.mxu0 0.0
    %1138 = vmatpush2.msra.mxu0 0.0
    %1139 = vmatprep.subr.mxu0 0.0
    %1140 = vmatpush2.msra.mxu0 0.0
    %1141 = vmatprep.mubr.f32.mxu0 0.0
    %1142 = vmatmul.mubr.f32.gmra.mxu0 %v1075
    %v1143 = vpop.f32.mrf.mxu0
    %v1144 = vadd.f32 %v1071, %v1143
    %v1145 = vpop.f32.mrf.mxu0
    %1146 = vdwg.mxu0
    %vm1147 = vcmask 74752
    %1148 = vst.msk [vmem:[#allocation2] sm:$0x3] %vm1147, %v1144
    // Predicated region
    $region22: #{lenet_forward.3} parent=1 // pred_check
      _
    $region23: #{lenet_forward.3} parent=1 // pred_check_branch
      %1150 = sbr.rel (0) target = $region25
    $region24: #{lenet_forward.3} parent=1 // pred_region
      %s1152 = ssub.s32 32, 32
      %1153 = vsyncadd [#allocation3], %s1152
      %s1155 = sshll.u32 [#allocation2], 4
      %s1156 = int_to_ptr.vmem [resolvable:$true] %s1155
      %1158 = dma.vmem_to_hbm [thread:$0]  %s1156, 32, %s5, [#allocation3]
    $region25: #{lenet_forward.3} parent=1 // pred_fallthru
      _
    // Predicated region
    $region26: #{lenet_forward.3} parent=1 // pred_check
      _
    $region27: #{lenet_forward.3} parent=1 // pred_check_branch
      %1160 = sbr.rel (0) target = $region29
    $region28: #{lenet_forward.3} parent=1 // pred_region
      %1161 = dma.done [#allocation3], 32
    $region29: #{lenet_forward.3} parent=1 // pred_fallthru
      _
    %1162 = vsyncpa [#allocation3], 1

</llo_original>
